<compile_context>
chip_gen: v7x
topology: tpu7x:2x2x1
jax: 0.10.0
libtpu: 0.0.40
codegen_flags: <defaults>
</compile_context>

<pallas_src>
import numpy as np
import jax
import jax.numpy as jnp
from jax.experimental import pallas as pl
from jax.experimental.pallas import tpu as pltpu

# ----------------------------- config (small shapes) -----------------------------
B = 8            # batch (graphs)
SEQ = 12         # tokens per example
VOCAB = 40       # vocabulary size
FEAT = 64        # feature_dim_size (768 in the original)
HIDDEN = 32      # hidden_size (256 in the original); gnn.out_dim == HIDDEN for att_op='mul'
NUM_CLASSES = 2
WINDOW = 3       # sliding-window size used by build_graph

LANE = 128       # TPU lane width
NUM_CHUNKS = 1   # single grid step -> M=128 slab on 1-TC chips; set 2 only on v7x if measured faster


def round_up(v, m):
    return ((v + m - 1) // m) * m


# ------------------------- graph construction (numpy glue) ------------------------
def build_graph(input_ids_np, word_embeddings_np, window_size=WINDOW):
    """ReGVD build_graph: unique-token nodes, binary co-occurrence edges in a sliding window."""
    x_adj, x_feat = [], []
    for doc_words in input_ids_np:
        doc_words = list(int(w) for w in doc_words)
        doc_vocab = sorted(set(doc_words))
        n = len(doc_vocab)
        wid = {w: i for i, w in enumerate(doc_vocab)}
        if len(doc_words) <= window_size:
            windows = [doc_words]
        else:
            windows = [doc_words[j:j + window_size]
                       for j in range(len(doc_words) - window_size + 1)]
        adj = np.zeros((n, n), dtype=np.float64)
        for window in windows:
            for p in range(1, len(window)):
                for q in range(p):
                    wp, wq = window[p], window[q]
                    if wp == wq:
                        continue
                    adj[wid[wp], wid[wq]] = 1.0  # weighted_graph=False -> binary
                    adj[wid[wq], wid[wp]] = 1.0
        x_adj.append(adj)
        x_feat.append(np.stack([word_embeddings_np[w] for w in doc_vocab], axis=0))
    return x_adj, x_feat


def normalize_adj(a):
    """D^{-1/2} A D^{-1/2} (symmetric normalization, no self-loop)."""
    rowsum = a.sum(1)
    with np.errstate(divide="ignore"):
        d_inv_sqrt = np.power(rowsum, -0.5)
    d_inv_sqrt[np.isinf(d_inv_sqrt)] = 0.0
    return d_inv_sqrt[:, None] * a * d_inv_sqrt[None, :]


def preprocess_batch(adj_list, feat_list, graphs_per_chunk, n_pad, f_pad):
    """Pack graphs into per-chunk slabs:
       features  (NUM_CHUNKS, G*n_pad, f_pad)
       adjacency (NUM_CHUNKS, G*n_pad, G*n_pad)  block-diagonal -> graphs never mix
       node mask (NUM_CHUNKS, G*n_pad, 1)        1.0 on real-node rows (lane-broadcast in kernel)
    All padding is zero; the kernel relies on zero-padded adjacency rows keeping padded-node
    rows of the GCN activations exactly zero."""
    num_chunks = len(adj_list) // graphs_per_chunk
    m = graphs_per_chunk * n_pad
    adj_out = np.zeros((num_chunks, m, m), np.float32)
    x_out = np.zeros((num_chunks, m, f_pad), np.float32)
    mask_out = np.zeros((num_chunks, m, 1), np.float32)
    for g in range(len(adj_list)):
        c, j = divmod(g, graphs_per_chunk)
        r0 = j * n_pad
        a = normalize_adj(adj_list[g]).astype(np.float32)
        n = a.shape[0]
        adj_out[c, r0:r0 + n, r0:r0 + n] = a
        f = feat_list[g]
        x_out[c, r0:r0 + n, :f.shape[1]] = f
        mask_out[c, r0:r0 + n, 0] = 1.0
    return x_out, adj_out, mask_out


# --------------------------------- parameters --------------------------------------
def init_params(key):
    ks = jax.random.split(key, 8)
    s = 0.1
    return {
        # GraphConvolution weights (no bias), layer0: F->H, layer1: H->H
        "w_gcn0": s * jax.random.normal(ks[0], (FEAT, HIDDEN), jnp.float32),
        "w_gcn1": s * jax.random.normal(ks[1], (HIDDEN, HIDDEN), jnp.float32),
        # soft attention linear H->1, and ln linear H->H
        "w_att": s * jax.random.normal(ks[2], (HIDDEN, 1), jnp.float32),
        "b_att": jnp.zeros((1, 1), jnp.float32),
        "w_ln": s * jax.random.normal(ks[3], (HIDDEN, HIDDEN), jnp.float32),
        "b_ln": jnp.zeros((1, HIDDEN), jnp.float32),
        # PredictionLayout: dense (out_dim -> hidden), tanh, out_proj (hidden -> 2)
        "w_dense": s * jax.random.normal(ks[4], (HIDDEN, HIDDEN), jnp.float32),
        "b_dense": jnp.zeros((1, HIDDEN), jnp.float32),
        "w_out": s * jax.random.normal(ks[5], (HIDDEN, NUM_CLASSES), jnp.float32),
        "b_out": jnp.zeros((1, NUM_CLASSES), jnp.float32),
    }


def pack_params(params, f_pad, h_pad):
    """Pad GCN weights to (8,128) tiles and pack the head linears (+biases) into one
    lane-dense slab of 3 x 128 lanes:
        block 0 [0       : h_pad  )  w_ln    / b_ln
        block 1 [h_pad   : 2*h_pad)  w_att   / b_att   (tiled across all lanes -> fused
                                                        matmul, gate already lane-broadcast)
        block 2 [2*h_pad : 3*h_pad)  shared: w_dense at lanes 0:H, w_out at lanes H:H+2
                                             b_dense at lanes 0:H, b_out at lanes H:H+2
    """
    feat, hidden = params["w_gcn0"].shape
    n_cls = params["w_out"].shape[1]
    w0 = np.zeros((f_pad, h_pad), np.float32)
    w0[:feat, :hidden] = params["w_gcn0"]
    w1 = np.zeros((h_pad, h_pad), np.float32)
    w1[:hidden, :hidden] = params["w_gcn1"]

    total = 3 * h_pad
    wh = np.zeros((h_pad, total), np.float32)
    bh = np.zeros((1, total), np.float32)
    # block 0: ln
    wh[:hidden, :hidden] = params["w_ln"]
    bh[0, :hidden] = params["b_ln"][0]
    # block 1: att, tiled across the whole 128-lane block
    wh[:hidden, h_pad:2 * h_pad] = np.tile(np.asarray(params["w_att"]), (1, h_pad))
    bh[0, h_pad:2 * h_pad] = float(params["b_att"][0, 0])
    # block 2 (shared): dense + out
    wh[:hidden, 2 * h_pad:2 * h_pad + hidden] = params["w_dense"]
    bh[0, 2 * h_pad:2 * h_pad + hidden] = params["b_dense"][0]
    wh[:hidden, 2 * h_pad + hidden:2 * h_pad + hidden + n_cls] = params["w_out"]
    bh[0, 2 * h_pad + hidden:2 * h_pad + hidden + n_cls] = params["b_out"][0]
    return w0, w1, wh, bh


# ------------------------------- Pallas kernel ------------------------------------
def make_kernel(graphs_per_chunk, n_pad, h_pad, hidden):
    g_cnt = graphs_per_chunk
    two_h = 2 * h_pad

    def kernel(x_ref, adj_ref, mask_ref, w0_ref, w1_ref, wh_ref, bh_ref, prob_ref):
        f32, bf16 = jnp.float32, jnp.bfloat16
        x = x_ref[0]        # (M, f_pad)  bf16, M = graphs_per_chunk * n_pad
        adj = adj_ref[0]    # (M, M)      bf16, block-diagonal normalized adjacency
        mask = mask_ref[0]  # (M, 1)      f32, 1.0 on real-node rows

        # --- GCN layer 0: relu(A @ (X @ W0)).  (`* mask` dropped: zero-padded adjacency
        #     rows already make padded-node rows exactly zero.)
        s0 = jnp.dot(x, w0_ref[...], preferred_element_type=f32)
        h = jnp.maximum(jnp.dot(adj, s0.astype(bf16), preferred_element_type=f32), 0.0)

        # --- GCN layer 1 (residual): h + relu(A @ (h @ W1))
        s1 = jnp.dot(h.astype(bf16), w1_ref[...], preferred_element_type=f32)
        h = h + jnp.maximum(jnp.dot(adj, s1.astype(bf16), preferred_element_type=f32), 0.0)

        # --- fused soft-attention + ln projection: one matmul over the first two lane blocks
        pre = (jnp.dot(h.astype(bf16), wh_ref[:, :two_h], preferred_element_type=f32)
               + bh_ref[:, :two_h])                          # (M, 2*h_pad)
        y = jnp.maximum(pre[:, :h_pad], 0.0)                 # relu(ln(h))
        att = jax.nn.sigmoid(pre[:, h_pad:two_h])            # sigmoid(att(h)), lane-broadcast
        z = att * y * mask                                   # (M, h_pad), >= 0 (pooling relies on this)

        # --- per-graph sum*max pooling (att_op='mul').
        #     (M, h_pad) -> (G, n_pad, h_pad): sublane split on an 8-boundary, layout-preserving.
        zg = z.reshape(g_cnt, n_pad, h_pad)
        g = jnp.sum(zg, axis=1) * jnp.max(zg, axis=1)        # (G, h_pad); lanes >= hidden are 0

        # --- prediction head, reusing the shared third lane block for BOTH matmuls:
        #       rows 0:H / lanes 0:H   = w_dense,  rows 0:H / lanes H:H+2 = w_out
        w_head = wh_ref[:, two_h:]                           # (h_pad, h_pad) bf16
        b_head = bh_ref[:, two_h:]                           # (1, h_pad) f32
        lane = jax.lax.broadcasted_iota(jnp.int32, (1, h_pad), 1)
        dense_mask = (lane < hidden).astype(f32)             # 1 on dense lanes, 0 elsewhere
        pre_d = (jnp.dot(g.astype(bf16), w_head, preferred_element_type=f32)
                 + b_head * dense_mask)                      # lanes 0:H = dense pre-activation
        d = jnp.tanh(pre_d) * dense_mask                     # zero the non-dense lanes
        logits = (jnp.dot(d.astype(bf16), w_head, preferred_element_type=f32)
                  + b_head)                                  # lanes H:H+2 = true logits
        # padded / junk lanes get sigmoid of garbage; the wrapper slice is the contract.
        prob_ref[0] = jax.nn.sigmoid(logits)                 # (G, h_pad), lane-dense store

    return kernel


def gnn_regvd_forward(x, adj, mask, w0, w1, wh, bh, *, graphs_per_chunk, n_pad,
                      hidden, num_classes):
    num_chunks, m, f_pad = x.shape
    h_pad = w0.shape[1]
    total_w = wh.shape[1]

    kernel = make_kernel(graphs_per_chunk, n_pad, h_pad, hidden)
    fixed = lambda shape: pl.BlockSpec(shape, lambda c, _s=shape: (0,) * len(_s))
    sem = ("parallel",) if num_chunks > 1 else ("arbitrary",)

    prob = pl.pallas_call(
        kernel,
        out_shape=jax.ShapeDtypeStruct((num_chunks, graphs_per_chunk, h_pad), jnp.float32),
        grid=(num_chunks,),
        in_specs=[
            pl.BlockSpec((1, m, f_pad), lambda c: (c, 0, 0)),   # node features (bf16)
            pl.BlockSpec((1, m, m), lambda c: (c, 0, 0)),       # block-diag adjacency (bf16)
            pl.BlockSpec((1, m, 1), lambda c: (c, 0, 0)),       # node mask (f32, lane-broadcast in kernel)
            fixed((f_pad, h_pad)),                              # w_gcn0 (bf16)
            fixed((h_pad, h_pad)),                              # w_gcn1 (bf16)
            fixed((h_pad, total_w)),                            # packed head weights (bf16)
            fixed((1, total_w)),                                # packed head biases (f32)
        ],
        out_specs=pl.BlockSpec((1, graphs_per_chunk, h_pad), lambda c: (c, 0, 0)),
        compiler_params=pltpu.CompilerParams(dimension_semantics=sem),
    )(x, adj, mask, w0, w1, wh, bh)

    prob = prob.reshape(num_chunks * graphs_per_chunk, h_pad)
    return prob[:, hidden:hidden + num_classes]


# ------------------------------------ main ------------------------------------------
if __name__ == "__main__":
    key = jax.random.PRNGKey(0)
    k_emb, k_ids, k_lab, k_par = jax.random.split(key, 4)

    # transformer word embeddings (synthetic, deterministic)
    word_embeddings = np.asarray(
        0.1 * jax.random.normal(k_emb, (VOCAB, FEAT), jnp.float32), dtype=np.float32)
    input_ids = np.asarray(
        jax.random.randint(k_ids, (B, SEQ), 0, VOCAB, dtype=jnp.int32))
    labels = jnp.asarray(
        jax.random.randint(k_lab, (B,), 0, 2, dtype=jnp.int32), dtype=jnp.float32)

    # graph construction (CPU/numpy preprocessing, exactly as in the original module)
    adj_list, feat_list = build_graph(input_ids, word_embeddings)

    assert B % NUM_CHUNKS == 0
    graphs_per_chunk = B // NUM_CHUNKS          # 8 graphs/chunk -> 8-sublane output block
    n_pad = max(8, round_up(max(a.shape[0] for a in adj_list), 8))
    f_pad = round_up(FEAT, LANE)
    h_pad = round_up(HIDDEN, LANE)

    x_np, adj_np, mask_np = preprocess_batch(
        adj_list, feat_list, graphs_per_chunk, n_pad, f_pad)

    params = init_params(k_par)
    w0, w1, wh, bh = pack_params(params, f_pad, h_pad)

    prob = gnn_regvd_forward(
        jnp.asarray(x_np, jnp.bfloat16), jnp.asarray(adj_np, jnp.bfloat16),
        jnp.asarray(mask_np),
        jnp.asarray(w0, jnp.bfloat16), jnp.asarray(w1, jnp.bfloat16),
        jnp.asarray(wh, jnp.bfloat16), jnp.asarray(bh),
        graphs_per_chunk=graphs_per_chunk, n_pad=n_pad,
        hidden=HIDDEN, num_classes=NUM_CLASSES)
    prob = jax.block_until_ready(prob)

    # BCE-style loss on class-0 probability, exactly as in the PyTorch forward
    loss = -(jnp.log(prob[:, 0] + 1e-10) * labels
             + jnp.log(1.0 - prob[:, 0] + 1e-10) * (1.0 - labels)).mean()
    loss = jax.block_until_ready(loss)

    assert prob.shape == (B, NUM_CLASSES)
    assert bool(jnp.all(jnp.isfinite(prob))) and bool(jnp.isfinite(loss))
    print("KERNEL_OK")
</pallas_src>

<mosaic_0001>
module attributes {stable_mosaic.version = 11 : i64} {
  func.func @kernel(%arg0: i32, %arg1: memref<1x128x128xbf16, #tpu.memory_space<vmem>>, %arg2: memref<1x128x128xbf16, #tpu.memory_space<vmem>>, %arg3: memref<1x128x1xf32, #tpu.memory_space<vmem>>, %arg4: memref<128x128xbf16, #tpu.memory_space<vmem>>, %arg5: memref<128x128xbf16, #tpu.memory_space<vmem>>, %arg6: memref<128x384xbf16, #tpu.memory_space<vmem>>, %arg7: memref<1x384xf32, #tpu.memory_space<vmem>>, %arg8: memref<1x8x128xf32, #tpu.memory_space<vmem>>) attributes {dimension_semantics = [#tpu.dimension_semantics<arbitrary>], iteration_bounds = array<i64: 1>, scalar_prefetch = 0 : i64, scratch_operands = 0 : i64, tpu.core_type = #tpu.core_type<tc>, window_params = [{transform_indices = @transform_0, window_bounds = array<i64: 1, 128, 128>}, {transform_indices = @transform_1, window_bounds = array<i64: 1, 128, 128>}, {transform_indices = @transform_2, window_bounds = array<i64: 1, 128, 1>}, {pipeline_mode = #tpu.pipeline_mode<synchronous>, transform_indices = @transform_3, window_bounds = array<i64: 128, 128>}, {pipeline_mode = #tpu.pipeline_mode<synchronous>, transform_indices = @transform_4, window_bounds = array<i64: 128, 128>}, {pipeline_mode = #tpu.pipeline_mode<synchronous>, transform_indices = @transform_5, window_bounds = array<i64: 128, 384>}, {pipeline_mode = #tpu.pipeline_mode<synchronous>, transform_indices = @transform_6, window_bounds = array<i64: 1, 384>}, {transform_indices = @transform_7, window_bounds = array<i64: 1, 8, 128>}]} {
    %c0 = arith.constant 0 : index
    %c0_0 = arith.constant 0 : index
    %c0_1 = arith.constant 0 : index
    %0 = vector.load %arg1[%c0, %c0_0, %c0_1] : memref<1x128x128xbf16, #tpu.memory_space<vmem>>, vector<1x128x128xbf16>
    %1 = vector.shape_cast %0 : vector<1x128x128xbf16> to vector<128x128xbf16>
    %c0_2 = arith.constant 0 : index
    %c0_3 = arith.constant 0 : index
    %c0_4 = arith.constant 0 : index
    %2 = vector.load %arg2[%c0_2, %c0_3, %c0_4] : memref<1x128x128xbf16, #tpu.memory_space<vmem>>, vector<1x128x128xbf16>
    %3 = vector.shape_cast %2 : vector<1x128x128xbf16> to vector<128x128xbf16>
    %c0_5 = arith.constant 0 : index
    %c0_6 = arith.constant 0 : index
    %c0_7 = arith.constant 0 : index
    %4 = vector.load %arg3[%c0_5, %c0_6, %c0_7] : memref<1x128x1xf32, #tpu.memory_space<vmem>>, vector<1x128x1xf32>
    %5 = vector.shape_cast %4 : vector<1x128x1xf32> to vector<128x1xf32>
    %c0_8 = arith.constant 0 : index
    %c0_9 = arith.constant 0 : index
    %6 = vector.load %arg4[%c0_8, %c0_9] : memref<128x128xbf16, #tpu.memory_space<vmem>>, vector<128x128xbf16>
    %cst = arith.constant dense<0.000000e+00> : vector<128x128xf32>
    %7 = tpu.matmul %1, %6, %cst {dimension_numbers = #tpu.dot_dimension_numbers<[1], [0], [0], [1], [0, 0, 1, 1], [], []>} : vector<128x128xbf16>, vector<128x128xbf16>, vector<128x128xf32> -> vector<128x128xf32>
    %8 = arith.truncf %7 : vector<128x128xf32> to vector<128x128xbf16>
    %cst_10 = arith.constant dense<0.000000e+00> : vector<128x128xf32>
    %9 = tpu.matmul %3, %8, %cst_10 {dimension_numbers = #tpu.dot_dimension_numbers<[1], [0], [0], [1], [0, 0, 1, 1], [], []>} : vector<128x128xbf16>, vector<128x128xbf16>, vector<128x128xf32> -> vector<128x128xf32>
    %cst_11 = arith.constant 0.000000e+00 : f32
    %10 = vector.broadcast %cst_11 : f32 to vector<128x128xf32>
    %11 = arith.maximumf %9, %10 : vector<128x128xf32>
    %12 = arith.truncf %11 : vector<128x128xf32> to vector<128x128xbf16>
    %c0_12 = arith.constant 0 : index
    %c0_13 = arith.constant 0 : index
    %13 = vector.load %arg5[%c0_12, %c0_13] : memref<128x128xbf16, #tpu.memory_space<vmem>>, vector<128x128xbf16>
    %cst_14 = arith.constant dense<0.000000e+00> : vector<128x128xf32>
    %14 = tpu.matmul %12, %13, %cst_14 {dimension_numbers = #tpu.dot_dimension_numbers<[1], [0], [0], [1], [0, 0, 1, 1], [], []>} : vector<128x128xbf16>, vector<128x128xbf16>, vector<128x128xf32> -> vector<128x128xf32>
    %15 = arith.truncf %14 : vector<128x128xf32> to vector<128x128xbf16>
    %cst_15 = arith.constant dense<0.000000e+00> : vector<128x128xf32>
    %16 = tpu.matmul %3, %15, %cst_15 {dimension_numbers = #tpu.dot_dimension_numbers<[1], [0], [0], [1], [0, 0, 1, 1], [], []>} : vector<128x128xbf16>, vector<128x128xbf16>, vector<128x128xf32> -> vector<128x128xf32>
    %cst_16 = arith.constant 0.000000e+00 : f32
    %17 = vector.broadcast %cst_16 : f32 to vector<128x128xf32>
    %18 = arith.maximumf %16, %17 : vector<128x128xf32>
    %19 = arith.addf %11, %18 : vector<128x128xf32>
    %20 = arith.truncf %19 : vector<128x128xf32> to vector<128x128xbf16>
    %c0_17 = arith.constant 0 : index
    %c0_18 = arith.constant 0 : index
    %21 = vector.load %arg6[%c0_17, %c0_18] : memref<128x384xbf16, #tpu.memory_space<vmem>>, vector<128x256xbf16>
    %cst_19 = arith.constant dense<0.000000e+00> : vector<128x256xf32>
    %22 = tpu.matmul %20, %21, %cst_19 {dimension_numbers = #tpu.dot_dimension_numbers<[1], [0], [0], [1], [0, 0, 1, 1], [], []>} : vector<128x128xbf16>, vector<128x256xbf16>, vector<128x256xf32> -> vector<128x256xf32>
    %c0_20 = arith.constant 0 : index
    %c0_21 = arith.constant 0 : index
    %23 = vector.load %arg7[%c0_20, %c0_21] : memref<1x384xf32, #tpu.memory_space<vmem>>, vector<1x256xf32>
    %24 = vector.broadcast %23 : vector<1x256xf32> to vector<128x256xf32>
    %25 = arith.addf %22, %24 : vector<128x256xf32>
    %26 = vector.extract_strided_slice %25 {offsets = [0, 0], sizes = [128, 128], strides = [1, 1]} : vector<128x256xf32> to vector<128x128xf32>
    %cst_22 = arith.constant 0.000000e+00 : f32
    %27 = vector.broadcast %cst_22 : f32 to vector<128x128xf32>
    %28 = arith.maximumf %26, %27 : vector<128x128xf32>
    %29 = vector.extract_strided_slice %25 {offsets = [0, 128], sizes = [128, 128], strides = [1, 1]} : vector<128x256xf32> to vector<128x128xf32>
    %30 = arith.negf %29 : vector<128x128xf32>
    %31 = math.exp %30 : vector<128x128xf32>
    %cst_23 = arith.constant 1.000000e+00 : f32
    %32 = vector.broadcast %cst_23 : f32 to vector<128x128xf32>
    %33 = arith.addf %32, %31 : vector<128x128xf32>
    %34 = arith.divf %32, %33 : vector<128x128xf32>
    %35 = arith.mulf %34, %28 : vector<128x128xf32>
    %36 = vector.broadcast %5 : vector<128x1xf32> to vector<128x128xf32>
    %37 = arith.mulf %35, %36 : vector<128x128xf32>
    %38 = vector.shape_cast %37 : vector<128x128xf32> to vector<8x16x128xf32>
    %cst_24 = arith.constant dense<0.000000e+00> : vector<8x128xf32>
    %39 = vector.multi_reduction <add>, %38, %cst_24 [1] : vector<8x16x128xf32> to vector<8x128xf32>
    %cst_25 = arith.constant dense<0xFF800000> : vector<8x128xf32>
    %40 = vector.multi_reduction <maximumf>, %38, %cst_25 [1] : vector<8x16x128xf32> to vector<8x128xf32>
    %41 = arith.mulf %39, %40 : vector<8x128xf32>
    %c0_26 = arith.constant 0 : index
    %c256 = arith.constant 256 : index
    %42 = vector.load %arg6[%c0_26, %c256] : memref<128x384xbf16, #tpu.memory_space<vmem>>, vector<128x128xbf16>
    %c0_27 = arith.constant 0 : index
    %c256_28 = arith.constant 256 : index
    %43 = vector.load %arg7[%c0_27, %c256_28] : memref<1x384xf32, #tpu.memory_space<vmem>>, vector<1x128xf32>
    %44 = tpu.iota {dimensions = array<i32: 1>} : vector<1x128xi32>
    %c32_i32 = arith.constant 32 : i32
    %45 = vector.broadcast %c32_i32 : i32 to vector<1x128xi32>
    %46 = arith.cmpi slt, %44, %45 : vector<1x128xi32>
    %47 = arith.extui %46 : vector<1x128xi1> to vector<1x128xi32>
    %48 = arith.sitofp %47 : vector<1x128xi32> to vector<1x128xf32>
    %49 = arith.truncf %41 : vector<8x128xf32> to vector<8x128xbf16>
    %cst_29 = arith.constant dense<0.000000e+00> : vector<8x128xf32>
    %50 = tpu.matmul %49, %42, %cst_29 {dimension_numbers = #tpu.dot_dimension_numbers<[1], [0], [0], [1], [0, 0, 1, 1], [], []>} : vector<8x128xbf16>, vector<128x128xbf16>, vector<8x128xf32> -> vector<8x128xf32>
    %51 = arith.mulf %43, %48 : vector<1x128xf32>
    %52 = vector.broadcast %51 : vector<1x128xf32> to vector<8x128xf32>
    %53 = arith.addf %50, %52 : vector<8x128xf32>
    %54 = math.tanh %53 : vector<8x128xf32>
    %55 = vector.broadcast %48 : vector<1x128xf32> to vector<8x128xf32>
    %56 = arith.mulf %54, %55 : vector<8x128xf32>
    %57 = arith.truncf %56 : vector<8x128xf32> to vector<8x128xbf16>
    %cst_30 = arith.constant dense<0.000000e+00> : vector<8x128xf32>
    %58 = tpu.matmul %57, %42, %cst_30 {dimension_numbers = #tpu.dot_dimension_numbers<[1], [0], [0], [1], [0, 0, 1, 1], [], []>} : vector<8x128xbf16>, vector<128x128xbf16>, vector<8x128xf32> -> vector<8x128xf32>
    %59 = vector.broadcast %43 : vector<1x128xf32> to vector<8x128xf32>
    %60 = arith.addf %58, %59 : vector<8x128xf32>
    %61 = arith.negf %60 : vector<8x128xf32>
    %62 = math.exp %61 : vector<8x128xf32>
    %cst_31 = arith.constant 1.000000e+00 : f32
    %63 = vector.broadcast %cst_31 : f32 to vector<8x128xf32>
    %64 = arith.addf %63, %62 : vector<8x128xf32>
    %65 = arith.divf %63, %64 : vector<8x128xf32>
    %c0_32 = arith.constant 0 : index
    %c0_33 = arith.constant 0 : index
    %c0_34 = arith.constant 0 : index
    %66 = vector.load %arg8[%c0_32, %c0_33, %c0_34] : memref<1x8x128xf32, #tpu.memory_space<vmem>>, vector<1x8x128xf32>
    %67 = vector.shape_cast %66 : vector<1x8x128xf32> to vector<8x128xf32>
    %68 = vector.shape_cast %65 : vector<8x128xf32> to vector<1x8x128xf32>
    tpu.vector_store %arg8[%c0_32, %c0_33, %c0_34], %68 {strides = array<i32>} : memref<1x8x128xf32, #tpu.memory_space<vmem>>, vector<1x8x128xf32>,
    return
  }
  func.func @transform_0(%arg0: i32) -> (i32, i32, i32) {
    %c0_i32 = arith.constant 0 : i32
    %c0_i32_0 = arith.constant 0 : i32
    %c0_i32_1 = arith.constant 0 : i32
    return %arg0, %c0_i32, %c0_i32_0 : i32, i32, i32
  }
  func.func @transform_1(%arg0: i32) -> (i32, i32, i32) {
    %c0_i32 = arith.constant 0 : i32
    %c0_i32_0 = arith.constant 0 : i32
    %c0_i32_1 = arith.constant 0 : i32
    return %arg0, %c0_i32, %c0_i32_0 : i32, i32, i32
  }
  func.func @transform_2(%arg0: i32) -> (i32, i32, i32) {
    %c0_i32 = arith.constant 0 : i32
    %c0_i32_0 = arith.constant 0 : i32
    %c0_i32_1 = arith.constant 0 : i32
    return %arg0, %c0_i32, %c0_i32_0 : i32, i32, i32
  }
  func.func @transform_3(%arg0: i32) -> (i32, i32) {
    %c0_i32 = arith.constant 0 : i32
    %c0_i32_0 = arith.constant 0 : i32
    %c0_i32_1 = arith.constant 0 : i32
    return %c0_i32, %c0_i32_0 : i32, i32
  }
  func.func @transform_4(%arg0: i32) -> (i32, i32) {
    %c0_i32 = arith.constant 0 : i32
    %c0_i32_0 = arith.constant 0 : i32
    %c0_i32_1 = arith.constant 0 : i32
    return %c0_i32, %c0_i32_0 : i32, i32
  }
  func.func @transform_5(%arg0: i32) -> (i32, i32) {
    %c0_i32 = arith.constant 0 : i32
    %c0_i32_0 = arith.constant 0 : i32
    %c0_i32_1 = arith.constant 0 : i32
    return %c0_i32, %c0_i32_0 : i32, i32
  }
  func.func @transform_6(%arg0: i32) -> (i32, i32) {
    %c0_i32 = arith.constant 0 : i32
    %c0_i32_0 = arith.constant 0 : i32
    %c0_i32_1 = arith.constant 0 : i32
    return %c0_i32, %c0_i32_0 : i32, i32
  }
  func.func @transform_7(%arg0: i32) -> (i32, i32, i32) {
    %c0_i32 = arith.constant 0 : i32
    %c0_i32_0 = arith.constant 0 : i32
    %c0_i32_1 = arith.constant 0 : i32
    return %arg0, %c0_i32, %c0_i32_0 : i32, i32, i32
  }
}

</mosaic_0001>

<llo_original>
// kernel: tpu_custom_call.1
$region0: #{tpu_custom_call.1}
  #allocation0 [shape = 'u32[]', space=smem, size = 0x4, offset = 0x4, fixed_abs, tag = 'smem constant byte address 0x4 - core index']
  #allocation1 [shape = 'u32[144,128]{1,0:T(1,128)}', space=vmem, size = 0x12000, scoped, tag = 'internal scratch']
  %s0 = inlined_call_operand.vmem [shape: bf16[1,128,128], index: 0, kind: input, shape index: {}]
  %s1 = inlined_call_operand.vmem [shape: bf16[1,128,128], index: 1, kind: input, shape index: {}]
  %s2 = inlined_call_operand.vmem [shape: f32[1,128,1], index: 2, kind: input, shape index: {}]
  %s3 = inlined_call_operand.hbm [shape: bf16[128,128], index: 3, kind: input, shape index: {}]
  %s4 = inlined_call_operand.hbm [shape: bf16[128,128], index: 4, kind: input, shape index: {}]
  %s5 = inlined_call_operand.hbm [shape: bf16[128,384], index: 5, kind: input, shape index: {}]
  %s6 = inlined_call_operand.vmem [shape: f32[1,384], index: 6, kind: input, shape index: {}]
  %s7 = inlined_call_operand.hbm [shape: f32[1,8,128], index: 7, kind: output, shape index: {}]
  %s8 = sld [smem:[#allocation0]]
  $region50: #{tpu_custom_call.1} parent=0
    _
  %s10 = ssub.s32 1, %s8
  %s11 = scalar_select 0, %s10, %s8
  $region1: #{tpu_custom_call.1} parent=0
    #allocation2 [shape = 'u8[32768]{0}', space=vmem, size = 0x8000, scoped, tag = 'input window, operand 3, single buffered']
    #allocation3 [shape = 's32[1]{0}', space=sflag, size = 0x4, scoped, tag = 'scoped memory for tpu_custom_call.1']
    #allocation4 [shape = 's32[1]{0}', space=sflag, size = 0x4, scoped, tag = 'scoped memory for tpu_custom_call.1']
    #allocation5 [shape = 'u8[32768]{0}', space=vmem, size = 0x8000, scoped, tag = 'input window, operand 4, single buffered']
    #allocation6 [shape = 's32[1]{0}', space=sflag, size = 0x4, scoped, tag = 'scoped memory for tpu_custom_call.1']
    #allocation7 [shape = 'u8[98304]{0}', space=vmem, size = 0x18000, scoped, tag = 'input window, operand 5, single buffered']
    #allocation8 [shape = 'u8[4096]{0}', space=vmem, size = 0x1000, scoped, tag = 'output window, operand 0, single buffered']
    %12 = vsyncpa [#allocation3], 0
    %13 = vsyncpa [#allocation6], 0
    %14 = vsyncpa [#allocation4], 0
    // Predicated region
    $region2: #{tpu_custom_call.1} parent=1 // pred_check
      _
    $region3: #{tpu_custom_call.1} parent=1 // pred_check_branch
      %16 = sbr.rel (0) target = $region5
    $region4: #{tpu_custom_call.1} parent=1 // pred_region
      _
    $region5: #{tpu_custom_call.1} parent=1 // pred_fallthru
      _
    // Predicated region
    $region6: #{tpu_custom_call.1} parent=1 // pred_check
      _
    $region7: #{tpu_custom_call.1} parent=1 // pred_check_branch
      %18 = sbr.rel (0) target = $region9
    $region8: #{tpu_custom_call.1} parent=1 // pred_region
      _
    $region9: #{tpu_custom_call.1} parent=1 // pred_fallthru
      _
    // Predicated region
    $region10: #{tpu_custom_call.1} parent=1 // pred_check
      _
    $region11: #{tpu_custom_call.1} parent=1 // pred_check_branch
      %20 = sbr.rel (0) target = $region13
    $region12: #{tpu_custom_call.1} parent=1 // pred_region
      _
    $region13: #{tpu_custom_call.1} parent=1 // pred_fallthru
      _
    // Predicated region
    $region14: #{tpu_custom_call.1} parent=1 // pred_check
      _
    $region15: #{tpu_custom_call.1} parent=1 // pred_check_branch
      %22 = sbr.rel (0) target = $region17
    $region16: #{tpu_custom_call.1} parent=1 // pred_region
      %s24 = ssub.s32 1024, 1024
      %25 = vsyncadd [#allocation3], %s24
      %s26 = sshll.u32 [#allocation2], 4
      %s27 = int_to_ptr.vmem [resolvable:$true] %s26
      %32 = dma.hbm_to_vmem [thread:$0]  %s3, 1024, %s27, [#allocation3], 64, 64, 4
    $region17: #{tpu_custom_call.1} parent=1 // pred_fallthru
      _
    // Predicated region
    $region18: #{tpu_custom_call.1} parent=1 // pred_check
      _
    $region19: #{tpu_custom_call.1} parent=1 // pred_check_branch
      %34 = sbr.rel (0) target = $region21
    $region20: #{tpu_custom_call.1} parent=1 // pred_region
      %s36 = ssub.s32 1024, 1024
      %37 = vsyncadd [#allocation6], %s36
      %s38 = sshll.u32 [#allocation5], 4
      %s39 = int_to_ptr.vmem [resolvable:$true] %s38
      %44 = dma.hbm_to_vmem [thread:$0]  %s4, 1024, %s39, [#allocation6], 64, 64, 4
    $region21: #{tpu_custom_call.1} parent=1 // pred_fallthru
      _
    // Predicated region
    $region22: #{tpu_custom_call.1} parent=1 // pred_check
      _
    $region23: #{tpu_custom_call.1} parent=1 // pred_check_branch
      %46 = sbr.rel (0) target = $region25
    $region24: #{tpu_custom_call.1} parent=1 // pred_region
      %s48 = ssub.s32 3072, 3072
      %49 = vsyncadd [#allocation6], %s48
      %s50 = sshll.u32 [#allocation7], 4
      %s51 = int_to_ptr.vmem [resolvable:$true] %s50
      %56 = dma.hbm_to_vmem [thread:$0]  %s5, 3072, %s51, [#allocation6], 192, 192, 12
    $region25: #{tpu_custom_call.1} parent=1 // pred_fallthru
      _
    // Predicated region
    $region26: #{tpu_custom_call.1} parent=1 // pred_check
      _
    $region27: #{tpu_custom_call.1} parent=1 // pred_check_branch
      %58 = sbr.rel (0) target = $region29
    $region28: #{tpu_custom_call.1} parent=1 // pred_region
      _
    $region29: #{tpu_custom_call.1} parent=1 // pred_fallthru
      _
    // Predicated region
    $region30: #{tpu_custom_call.1} parent=1 // pred_check
      _
    $region31: #{tpu_custom_call.1} parent=1 // pred_check_branch
      %60 = sbr.rel (0) target = $region33
    $region32: #{tpu_custom_call.1} parent=1 // pred_region
      %61 = dma.done [#allocation3], 1024
    $region33: #{tpu_custom_call.1} parent=1 // pred_fallthru
      _
    // Predicated region
    $region34: #{tpu_custom_call.1} parent=1 // pred_check
      _
    $region35: #{tpu_custom_call.1} parent=1 // pred_check_branch
      %63 = sbr.rel (0) target = $region37
    $region36: #{tpu_custom_call.1} parent=1 // pred_region
      %64 = dma.done [#allocation6], 1024
    $region37: #{tpu_custom_call.1} parent=1 // pred_fallthru
      _
    // Predicated region
    $region38: #{tpu_custom_call.1} parent=1 // pred_check
      _
    $region39: #{tpu_custom_call.1} parent=1 // pred_check_branch
      %66 = sbr.rel (0) target = $region41
    $region40: #{tpu_custom_call.1} parent=1 // pred_region
      %67 = dma.done [#allocation6], 3072
    $region41: #{tpu_custom_call.1} parent=1 // pred_fallthru
      _
    %v69 = vld [vmem:[%s0] sm:$0xf]
    %v70 = vld [vmem:[%s0 + $0x4] sm:$0xf]
    %v71 = vld [vmem:[%s0 + $0x8] sm:$0xf]
    %v72 = vld [vmem:[%s0 + $0xc] sm:$0xf]
    %v73 = vld [vmem:[%s0 + $0x10] sm:$0xf]
    %v74 = vld [vmem:[%s0 + $0x14] sm:$0xf]
    %v75 = vld [vmem:[%s0 + $0x18] sm:$0xf]
    %v76 = vld [vmem:[%s0 + $0x1c] sm:$0xf]
    %v77 = vld [vmem:[%s0 + $0x20] sm:$0xf]
    %v78 = vld [vmem:[%s0 + $0x24] sm:$0xf]
    %v79 = vld [vmem:[%s0 + $0x28] sm:$0xf]
    %v80 = vld [vmem:[%s0 + $0x2c] sm:$0xf]
    %v81 = vld [vmem:[%s0 + $0x30] sm:$0xf]
    %v82 = vld [vmem:[%s0 + $0x34] sm:$0xf]
    %v83 = vld [vmem:[%s0 + $0x38] sm:$0xf]
    %v84 = vld [vmem:[%s0 + $0x3c] sm:$0xf]
    %v85 = vld [vmem:[%s1] sm:$0xf]
    %v86 = vld [vmem:[%s1 + $0x4] sm:$0xf]
    %v87 = vld [vmem:[%s1 + $0x8] sm:$0xf]
    %v88 = vld [vmem:[%s1 + $0xc] sm:$0xf]
    %v89 = vld [vmem:[%s1 + $0x10] sm:$0xf]
    %v90 = vld [vmem:[%s1 + $0x14] sm:$0xf]
    %v91 = vld [vmem:[%s1 + $0x18] sm:$0xf]
    %v92 = vld [vmem:[%s1 + $0x1c] sm:$0xf]
    %v93 = vld [vmem:[%s1 + $0x20] sm:$0xf]
    %v94 = vld [vmem:[%s1 + $0x24] sm:$0xf]
    %v95 = vld [vmem:[%s1 + $0x28] sm:$0xf]
    %v96 = vld [vmem:[%s1 + $0x2c] sm:$0xf]
    %v97 = vld [vmem:[%s1 + $0x30] sm:$0xf]
    %v98 = vld [vmem:[%s1 + $0x34] sm:$0xf]
    %v99 = vld [vmem:[%s1 + $0x38] sm:$0xf]
    %v100 = vld [vmem:[%s1 + $0x3c] sm:$0xf]
    %v101 = vld [vmem:[%s2] sm:$0xff]
    %v102 = vld [vmem:[%s2 + $0x8] sm:$0xff]
    %v103 = vld [vmem:[%s2 + $0x10] sm:$0xff]
    %v104 = vld [vmem:[%s2 + $0x18] sm:$0xff]
    %v105 = vld [vmem:[%s2 + $0x20] sm:$0xff]
    %v106 = vld [vmem:[%s2 + $0x28] sm:$0xff]
    %v107 = vld [vmem:[%s2 + $0x30] sm:$0xff]
    %v108 = vld [vmem:[%s2 + $0x38] sm:$0xff]
    %v109 = vld [vmem:[%s2 + $0x40] sm:$0xff]
    %v110 = vld [vmem:[%s2 + $0x48] sm:$0xff]
    %v111 = vld [vmem:[%s2 + $0x50] sm:$0xff]
    %v112 = vld [vmem:[%s2 + $0x58] sm:$0xff]
    %v113 = vld [vmem:[%s2 + $0x60] sm:$0xff]
    %v114 = vld [vmem:[%s2 + $0x68] sm:$0xff]
    %v115 = vld [vmem:[%s2 + $0x70] sm:$0xff]
    %v116 = vld [vmem:[%s2 + $0x78] sm:$0xff]
    %v117 = vld [vmem:[#allocation2] sm:$0xf]
    %v118 = vld [vmem:[#allocation2 + $0x4] sm:$0xf]
    %v119 = vld [vmem:[#allocation2 + $0x8] sm:$0xf]
    %v120 = vld [vmem:[#allocation2 + $0xc] sm:$0xf]
    %v121 = vld [vmem:[#allocation2 + $0x10] sm:$0xf]
    %v122 = vld [vmem:[#allocation2 + $0x14] sm:$0xf]
    %v123 = vld [vmem:[#allocation2 + $0x18] sm:$0xf]
    %v124 = vld [vmem:[#allocation2 + $0x1c] sm:$0xf]
    %v125 = vld [vmem:[#allocation2 + $0x20] sm:$0xf]
    %v126 = vld [vmem:[#allocation2 + $0x24] sm:$0xf]
    %v127 = vld [vmem:[#allocation2 + $0x28] sm:$0xf]
    %v128 = vld [vmem:[#allocation2 + $0x2c] sm:$0xf]
    %v129 = vld [vmem:[#allocation2 + $0x30] sm:$0xf]
    %v130 = vld [vmem:[#allocation2 + $0x34] sm:$0xf]
    %v131 = vld [vmem:[#allocation2 + $0x38] sm:$0xf]
    %v132 = vld [vmem:[#allocation2 + $0x3c] sm:$0xf]
    %v149 = vunpack.c.l.b16 %v69
    %v150 = vunpack.c.l.b16 %v70
    %v151 = vunpack.c.l.b16 %v71
    %v152 = vunpack.c.l.b16 %v72
    %v153 = vunpack.c.l.b16 %v73
    %v154 = vunpack.c.l.b16 %v74
    %v155 = vunpack.c.l.b16 %v75
    %v156 = vunpack.c.l.b16 %v76
    %v157 = vunpack.c.l.b16 %v77
    %v158 = vunpack.c.l.b16 %v78
    %v159 = vunpack.c.l.b16 %v79
    %v160 = vunpack.c.l.b16 %v80
    %v161 = vunpack.c.l.b16 %v81
    %v162 = vunpack.c.l.b16 %v82
    %v163 = vunpack.c.l.b16 %v83
    %v164 = vunpack.c.l.b16 %v84
    %v165 = vpack.c.b16 %v150, %v149
    %v166 = vpack.c.b16 %v152, %v151
    %v167 = vpack.c.b16 %v154, %v153
    %v168 = vpack.c.b16 %v156, %v155
    %v169 = vpack.c.b16 %v158, %v157
    %v170 = vpack.c.b16 %v160, %v159
    %v171 = vpack.c.b16 %v162, %v161
    %v172 = vpack.c.b16 %v164, %v163
    %v197 = vunpack.c.l.b16 %v117
    %v198 = vunpack.c.l.b16 %v118
    %v199 = vunpack.c.l.b16 %v119
    %v200 = vunpack.c.l.b16 %v120
    %v201 = vunpack.c.l.b16 %v121
    %v202 = vunpack.c.l.b16 %v122
    %v203 = vunpack.c.l.b16 %v123
    %v204 = vunpack.c.l.b16 %v124
    %v205 = vunpack.c.l.b16 %v125
    %v206 = vunpack.c.l.b16 %v126
    %v207 = vunpack.c.l.b16 %v127
    %v208 = vunpack.c.l.b16 %v128
    %v209 = vunpack.c.l.b16 %v129
    %v210 = vunpack.c.l.b16 %v130
    %v211 = vunpack.c.l.b16 %v131
    %v212 = vunpack.c.l.b16 %v132
    %v213 = vpack.c.b16 %v198, %v197
    %v214 = vpack.c.b16 %v200, %v199
    %v215 = vpack.c.b16 %v202, %v201
    %v216 = vpack.c.b16 %v204, %v203
    %v217 = vpack.c.b16 %v206, %v205
    %v218 = vpack.c.b16 %v208, %v207
    %v219 = vpack.c.b16 %v210, %v209
    %v220 = vpack.c.b16 %v212, %v211
    %229 = vmatprep.subr.bf16.mxu0 0
    %230 = vmatpush1.bf16.msra.mxu0 %v213
    %231 = vmatprep.subr.bf16.mxu0 0
    %232 = vmatpush1.bf16.msra.mxu0 %v214
    %233 = vmatprep.subr.bf16.mxu0 0
    %234 = vmatpush1.bf16.msra.mxu0 %v215
    %235 = vmatprep.subr.bf16.mxu0 0
    %236 = vmatpush1.bf16.msra.mxu0 %v216
    %237 = vmatprep.subr.bf16.mxu0 0
    %238 = vmatpush1.bf16.msra.mxu0 %v217
    %239 = vmatprep.subr.bf16.mxu0 0
    %240 = vmatpush1.bf16.msra.mxu0 %v218
    %241 = vmatprep.subr.bf16.mxu0 0
    %242 = vmatpush1.bf16.msra.mxu0 %v219
    %243 = vmatprep.subr.bf16.mxu0 0
    %244 = vmatpush1.bf16.msra.mxu0 %v220
    %245 = vmatprep.subr.bf16.mxu0 0
    %246 = vmatpush1.bf16.msra.mxu0 0
    %247 = vmatprep.subr.bf16.mxu0 0
    %248 = vmatpush1.bf16.msra.mxu0 0
    %249 = vmatprep.subr.bf16.mxu0 0
    %250 = vmatpush1.bf16.msra.mxu0 0
    %251 = vmatprep.subr.bf16.mxu0 0
    %252 = vmatpush1.bf16.msra.mxu0 0
    %253 = vmatprep.subr.bf16.mxu0 0
    %254 = vmatpush1.bf16.msra.mxu0 0
    %255 = vmatprep.subr.bf16.mxu0 0
    %256 = vmatpush1.bf16.msra.mxu0 0
    %257 = vmatprep.subr.bf16.mxu0 0
    %258 = vmatpush1.bf16.msra.mxu0 0
    %259 = vmatprep.subr.bf16.mxu0 0
    %260 = vmatpush1.bf16.msra.mxu0 0
    %261 = vmatprep.mubr.bf16.mxu0 0
    %262 = vmatmul.mubr.bf16.gmra.mrb[0].mxu0 %v165
    %v263 = vpop.f32.mrb[0].mxu0
    %v264 = vadd.f32 0.0, %v263
    %v265 = vpop.f32.mrb[0].mxu0
    %v266 = vpop.f32.mrb[0].mxu0
    %v267 = vadd.f32 0.0, %v266
    %v268 = vpop.f32.mrb[0].mxu0
    %269 = vmatprep.mubr.bf16.mxu0 0
    %270 = vmatmul.mubr.bf16.gmra.mrb[0].mxu0 %v166
    %v271 = vpop.f32.mrb[0].mxu0
    %v272 = vadd.f32 0.0, %v271
    %v273 = vpop.f32.mrb[0].mxu0
    %v274 = vpop.f32.mrb[0].mxu0
    %v275 = vadd.f32 0.0, %v274
    %v276 = vpop.f32.mrb[0].mxu0
    %277 = vmatprep.mubr.bf16.mxu0 0
    %278 = vmatmul.mubr.bf16.gmra.mrb[0].mxu0 %v167
    %v279 = vpop.f32.mrb[0].mxu0
    %v280 = vadd.f32 0.0, %v279
    %v281 = vpop.f32.mrb[0].mxu0
    %v282 = vpop.f32.mrb[0].mxu0
    %v283 = vadd.f32 0.0, %v282
    %v284 = vpop.f32.mrb[0].mxu0
    %285 = vmatprep.mubr.bf16.mxu0 0
    %286 = vmatmul.mubr.bf16.gmra.mrb[0].mxu0 %v168
    %v287 = vpop.f32.mrb[0].mxu0
    %v288 = vadd.f32 0.0, %v287
    %v289 = vpop.f32.mrb[0].mxu0
    %v290 = vpop.f32.mrb[0].mxu0
    %v291 = vadd.f32 0.0, %v290
    %v292 = vpop.f32.mrb[0].mxu0
    %293 = vmatprep.mubr.bf16.mxu0 0
    %294 = vmatmul.mubr.bf16.gmra.mrb[0].mxu0 %v169
    %v295 = vpop.f32.mrb[0].mxu0
    %v296 = vadd.f32 0.0, %v295
    %v297 = vpop.f32.mrb[0].mxu0
    %v298 = vpop.f32.mrb[0].mxu0
    %v299 = vadd.f32 0.0, %v298
    %v300 = vpop.f32.mrb[0].mxu0
    %301 = vmatprep.mubr.bf16.mxu0 0
    %302 = vmatmul.mubr.bf16.gmra.mrb[0].mxu0 %v170
    %v303 = vpop.f32.mrb[0].mxu0
    %v304 = vadd.f32 0.0, %v303
    %v305 = vpop.f32.mrb[0].mxu0
    %v306 = vpop.f32.mrb[0].mxu0
    %v307 = vadd.f32 0.0, %v306
    %v308 = vpop.f32.mrb[0].mxu0
    %309 = vmatprep.mubr.bf16.mxu0 0
    %310 = vmatmul.mubr.bf16.gmra.mrb[0].mxu0 %v171
    %v311 = vpop.f32.mrb[0].mxu0
    %v312 = vadd.f32 0.0, %v311
    %v313 = vpop.f32.mrb[0].mxu0
    %v314 = vpop.f32.mrb[0].mxu0
    %v315 = vadd.f32 0.0, %v314
    %v316 = vpop.f32.mrb[0].mxu0
    %317 = vmatprep.mubr.bf16.mxu0 0
    %318 = vmatmul.mubr.bf16.gmra.mrb[0].mxu0 %v172
    %v319 = vpop.f32.mrb[0].mxu0
    %v320 = vadd.f32 0.0, %v319
    %v321 = vpop.f32.mrb[0].mxu0
    %v322 = vpop.f32.mrb[0].mxu0
    %v323 = vadd.f32 0.0, %v322
    %v324 = vpop.f32.mrb[0].mxu0
    %325 = vdwg.mxu0
    %v326 = vpack.c.bf16 %v267, %v264
    %v327 = vpack.c.bf16 %v275, %v272
    %v328 = vpack.c.bf16 %v283, %v280
    %v329 = vpack.c.bf16 %v291, %v288
    %v330 = vpack.c.bf16 %v299, %v296
    %v331 = vpack.c.bf16 %v307, %v304
    %v332 = vpack.c.bf16 %v315, %v312
    %v333 = vpack.c.bf16 %v323, %v320
    %v350 = vunpack.c.l.b16 %v85
    %v351 = vunpack.c.l.b16 %v86
    %v352 = vunpack.c.l.b16 %v87
    %v353 = vunpack.c.l.b16 %v88
    %v354 = vunpack.c.l.b16 %v89
    %v355 = vunpack.c.l.b16 %v90
    %v356 = vunpack.c.l.b16 %v91
    %v357 = vunpack.c.l.b16 %v92
    %v358 = vunpack.c.l.b16 %v93
    %v359 = vunpack.c.l.b16 %v94
    %v360 = vunpack.c.l.b16 %v95
    %v361 = vunpack.c.l.b16 %v96
    %v362 = vunpack.c.l.b16 %v97
    %v363 = vunpack.c.l.b16 %v98
    %v364 = vunpack.c.l.b16 %v99
    %v365 = vunpack.c.l.b16 %v100
    %v366 = vpack.c.b16 %v351, %v350
    %v367 = vpack.c.b16 %v353, %v352
    %v368 = vpack.c.b16 %v355, %v354
    %v369 = vpack.c.b16 %v357, %v356
    %v370 = vpack.c.b16 %v359, %v358
    %v371 = vpack.c.b16 %v361, %v360
    %v372 = vpack.c.b16 %v363, %v362
    %v373 = vpack.c.b16 %v365, %v364
    %382 = vmatprep.subr.bf16.mxu0 0
    %383 = vmatpush1.bf16.msra.mxu0 %v326
    %384 = vmatprep.subr.bf16.mxu0 0
    %385 = vmatpush1.bf16.msra.mxu0 %v327
    %386 = vmatprep.subr.bf16.mxu0 0
    %387 = vmatpush1.bf16.msra.mxu0 %v328
    %388 = vmatprep.subr.bf16.mxu0 0
    %389 = vmatpush1.bf16.msra.mxu0 %v329
    %390 = vmatprep.subr.bf16.mxu0 0
    %391 = vmatpush1.bf16.msra.mxu0 %v330
    %392 = vmatprep.subr.bf16.mxu0 0
    %393 = vmatpush1.bf16.msra.mxu0 %v331
    %394 = vmatprep.subr.bf16.mxu0 0
    %395 = vmatpush1.bf16.msra.mxu0 %v332
    %396 = vmatprep.subr.bf16.mxu0 0
    %397 = vmatpush1.bf16.msra.mxu0 %v333
    %398 = vmatprep.subr.bf16.mxu0 0
    %399 = vmatpush1.bf16.msra.mxu0 0
    %400 = vmatprep.subr.bf16.mxu0 0
    %401 = vmatpush1.bf16.msra.mxu0 0
    %402 = vmatprep.subr.bf16.mxu0 0
    %403 = vmatpush1.bf16.msra.mxu0 0
    %404 = vmatprep.subr.bf16.mxu0 0
    %405 = vmatpush1.bf16.msra.mxu0 0
    %406 = vmatprep.subr.bf16.mxu0 0
    %407 = vmatpush1.bf16.msra.mxu0 0
    %408 = vmatprep.subr.bf16.mxu0 0
    %409 = vmatpush1.bf16.msra.mxu0 0
    %410 = vmatprep.subr.bf16.mxu0 0
    %411 = vmatpush1.bf16.msra.mxu0 0
    %412 = vmatprep.subr.bf16.mxu0 0
    %413 = vmatpush1.bf16.msra.mxu0 0
    %414 = vmatprep.mubr.bf16.mxu0 0
    %415 = vmatmul.mubr.bf16.gmra.mrb[0].mxu0 %v366
    %v416 = vpop.f32.mrb[0].mxu0
    %v417 = vadd.f32 0.0, %v416
    %v418 = vpop.f32.mrb[0].mxu0
    %v419 = vpop.f32.mrb[0].mxu0
    %v420 = vadd.f32 0.0, %v419
    %v421 = vpop.f32.mrb[0].mxu0
    %422 = vmatprep.mubr.bf16.mxu0 0
    %423 = vmatmul.mubr.bf16.gmra.mrb[0].mxu0 %v367
    %v424 = vpop.f32.mrb[0].mxu0
    %v425 = vadd.f32 0.0, %v424
    %v426 = vpop.f32.mrb[0].mxu0
    %v427 = vpop.f32.mrb[0].mxu0
    %v428 = vadd.f32 0.0, %v427
    %v429 = vpop.f32.mrb[0].mxu0
    %430 = vmatprep.mubr.bf16.mxu0 0
    %431 = vmatmul.mubr.bf16.gmra.mrb[0].mxu0 %v368
    %v432 = vpop.f32.mrb[0].mxu0
    %v433 = vadd.f32 0.0, %v432
    %v434 = vpop.f32.mrb[0].mxu0
    %v435 = vpop.f32.mrb[0].mxu0
    %v436 = vadd.f32 0.0, %v435
    %v437 = vpop.f32.mrb[0].mxu0
    %438 = vmatprep.mubr.bf16.mxu0 0
    %439 = vmatmul.mubr.bf16.gmra.mrb[0].mxu0 %v369
    %v440 = vpop.f32.mrb[0].mxu0
    %v441 = vadd.f32 0.0, %v440
    %v442 = vpop.f32.mrb[0].mxu0
    %v443 = vpop.f32.mrb[0].mxu0
    %v444 = vadd.f32 0.0, %v443
    %v445 = vpop.f32.mrb[0].mxu0
    %446 = vmatprep.mubr.bf16.mxu0 0
    %447 = vmatmul.mubr.bf16.gmra.mrb[0].mxu0 %v370
    %v448 = vpop.f32.mrb[0].mxu0
    %v449 = vadd.f32 0.0, %v448
    %v450 = vpop.f32.mrb[0].mxu0
    %v451 = vpop.f32.mrb[0].mxu0
    %v452 = vadd.f32 0.0, %v451
    %v453 = vpop.f32.mrb[0].mxu0
    %454 = vmatprep.mubr.bf16.mxu0 0
    %455 = vmatmul.mubr.bf16.gmra.mrb[0].mxu0 %v371
    %v456 = vpop.f32.mrb[0].mxu0
    %v457 = vadd.f32 0.0, %v456
    %v458 = vpop.f32.mrb[0].mxu0
    %v459 = vpop.f32.mrb[0].mxu0
    %v460 = vadd.f32 0.0, %v459
    %v461 = vpop.f32.mrb[0].mxu0
    %462 = vmatprep.mubr.bf16.mxu0 0
    %463 = vmatmul.mubr.bf16.gmra.mrb[0].mxu0 %v372
    %v464 = vpop.f32.mrb[0].mxu0
    %v465 = vadd.f32 0.0, %v464
    %v466 = vpop.f32.mrb[0].mxu0
    %v467 = vpop.f32.mrb[0].mxu0
    %v468 = vadd.f32 0.0, %v467
    %v469 = vpop.f32.mrb[0].mxu0
    %470 = vmatprep.mubr.bf16.mxu0 0
    %471 = vmatmul.mubr.bf16.gmra.mrb[0].mxu0 %v373
    %v472 = vpop.f32.mrb[0].mxu0
    %v473 = vadd.f32 0.0, %v472
    %v474 = vpop.f32.mrb[0].mxu0
    %v475 = vpop.f32.mrb[0].mxu0
    %v476 = vadd.f32 0.0, %v475
    %v477 = vpop.f32.mrb[0].mxu0
    %478 = vdwg.mxu0
    %v479 = vmax.f32 %v417, 0.0
    %v480 = vmax.f32 %v420, 0.0
    %v481 = vmax.f32 %v425, 0.0
    %v482 = vmax.f32 %v428, 0.0
    %v483 = vmax.f32 %v433, 0.0
    %v484 = vmax.f32 %v436, 0.0
    %v485 = vmax.f32 %v441, 0.0
    %v486 = vmax.f32 %v444, 0.0
    %v487 = vmax.f32 %v449, 0.0
    %v488 = vmax.f32 %v452, 0.0
    %v489 = vmax.f32 %v457, 0.0
    %v490 = vmax.f32 %v460, 0.0
    %v491 = vmax.f32 %v465, 0.0
    %v492 = vmax.f32 %v468, 0.0
    %v493 = vmax.f32 %v473, 0.0
    %v494 = vmax.f32 %v476, 0.0
    %v495 = vpack.c.bf16 %v480, %v479
    %v496 = vpack.c.bf16 %v482, %v481
    %v497 = vpack.c.bf16 %v484, %v483
    %v498 = vpack.c.bf16 %v486, %v485
    %v499 = vpack.c.bf16 %v488, %v487
    %v500 = vpack.c.bf16 %v490, %v489
    %v501 = vpack.c.bf16 %v492, %v491
    %v502 = vpack.c.bf16 %v494, %v493
    %v503 = vld [vmem:[#allocation5] sm:$0xf]
    %v504 = vld [vmem:[#allocation5 + $0x4] sm:$0xf]
    %v505 = vld [vmem:[#allocation5 + $0x8] sm:$0xf]
    %v506 = vld [vmem:[#allocation5 + $0xc] sm:$0xf]
    %v507 = vld [vmem:[#allocation5 + $0x10] sm:$0xf]
    %v508 = vld [vmem:[#allocation5 + $0x14] sm:$0xf]
    %v509 = vld [vmem:[#allocation5 + $0x18] sm:$0xf]
    %v510 = vld [vmem:[#allocation5 + $0x1c] sm:$0xf]
    %v511 = vld [vmem:[#allocation5 + $0x20] sm:$0xf]
    %v512 = vld [vmem:[#allocation5 + $0x24] sm:$0xf]
    %v513 = vld [vmem:[#allocation5 + $0x28] sm:$0xf]
    %v514 = vld [vmem:[#allocation5 + $0x2c] sm:$0xf]
    %v515 = vld [vmem:[#allocation5 + $0x30] sm:$0xf]
    %v516 = vld [vmem:[#allocation5 + $0x34] sm:$0xf]
    %v517 = vld [vmem:[#allocation5 + $0x38] sm:$0xf]
    %v518 = vld [vmem:[#allocation5 + $0x3c] sm:$0xf]
    %v535 = vunpack.c.l.b16 %v503
    %v536 = vunpack.c.l.b16 %v504
    %v537 = vunpack.c.l.b16 %v505
    %v538 = vunpack.c.l.b16 %v506
    %v539 = vunpack.c.l.b16 %v507
    %v540 = vunpack.c.l.b16 %v508
    %v541 = vunpack.c.l.b16 %v509
    %v542 = vunpack.c.l.b16 %v510
    %v543 = vunpack.c.l.b16 %v511
    %v544 = vunpack.c.l.b16 %v512
    %v545 = vunpack.c.l.b16 %v513
    %v546 = vunpack.c.l.b16 %v514
    %v547 = vunpack.c.l.b16 %v515
    %v548 = vunpack.c.l.b16 %v516
    %v549 = vunpack.c.l.b16 %v517
    %v550 = vunpack.c.l.b16 %v518
    %v551 = vpack.c.b16 %v536, %v535
    %v552 = vpack.c.b16 %v538, %v537
    %v553 = vpack.c.b16 %v540, %v539
    %v554 = vpack.c.b16 %v542, %v541
    %v555 = vpack.c.b16 %v544, %v543
    %v556 = vpack.c.b16 %v546, %v545
    %v557 = vpack.c.b16 %v548, %v547
    %v558 = vpack.c.b16 %v550, %v549
    %567 = vmatprep.subr.bf16.mxu0 0
    %568 = vmatpush1.bf16.msra.mxu0 %v551
    %569 = vmatprep.subr.bf16.mxu0 0
    %570 = vmatpush1.bf16.msra.mxu0 %v552
    %571 = vmatprep.subr.bf16.mxu0 0
    %572 = vmatpush1.bf16.msra.mxu0 %v553
    %573 = vmatprep.subr.bf16.mxu0 0
    %574 = vmatpush1.bf16.msra.mxu0 %v554
    %575 = vmatprep.subr.bf16.mxu0 0
    %576 = vmatpush1.bf16.msra.mxu0 %v555
    %577 = vmatprep.subr.bf16.mxu0 0
    %578 = vmatpush1.bf16.msra.mxu0 %v556
    %579 = vmatprep.subr.bf16.mxu0 0
    %580 = vmatpush1.bf16.msra.mxu0 %v557
    %581 = vmatprep.subr.bf16.mxu0 0
    %582 = vmatpush1.bf16.msra.mxu0 %v558
    %583 = vmatprep.subr.bf16.mxu0 0
    %584 = vmatpush1.bf16.msra.mxu0 0
    %585 = vmatprep.subr.bf16.mxu0 0
    %586 = vmatpush1.bf16.msra.mxu0 0
    %587 = vmatprep.subr.bf16.mxu0 0
    %588 = vmatpush1.bf16.msra.mxu0 0
    %589 = vmatprep.subr.bf16.mxu0 0
    %590 = vmatpush1.bf16.msra.mxu0 0
    %591 = vmatprep.subr.bf16.mxu0 0
    %592 = vmatpush1.bf16.msra.mxu0 0
    %593 = vmatprep.subr.bf16.mxu0 0
    %594 = vmatpush1.bf16.msra.mxu0 0
    %595 = vmatprep.subr.bf16.mxu0 0
    %596 = vmatpush1.bf16.msra.mxu0 0
    %597 = vmatprep.subr.bf16.mxu0 0
    %598 = vmatpush1.bf16.msra.mxu0 0
    %599 = vmatprep.mubr.bf16.mxu0 0
    %600 = vmatmul.mubr.bf16.gmra.mrb[0].mxu0 %v495
    %v601 = vpop.f32.mrb[0].mxu0
    %v602 = vadd.f32 0.0, %v601
    %v603 = vpop.f32.mrb[0].mxu0
    %v604 = vpop.f32.mrb[0].mxu0
    %v605 = vadd.f32 0.0, %v604
    %v606 = vpop.f32.mrb[0].mxu0
    %607 = vmatprep.mubr.bf16.mxu0 0
    %608 = vmatmul.mubr.bf16.gmra.mrb[0].mxu0 %v496
    %v609 = vpop.f32.mrb[0].mxu0
    %v610 = vadd.f32 0.0, %v609
    %v611 = vpop.f32.mrb[0].mxu0
    %v612 = vpop.f32.mrb[0].mxu0
    %v613 = vadd.f32 0.0, %v612
    %v614 = vpop.f32.mrb[0].mxu0
    %615 = vmatprep.mubr.bf16.mxu0 0
    %616 = vmatmul.mubr.bf16.gmra.mrb[0].mxu0 %v497
    %v617 = vpop.f32.mrb[0].mxu0
    %v618 = vadd.f32 0.0, %v617
    %v619 = vpop.f32.mrb[0].mxu0
    %v620 = vpop.f32.mrb[0].mxu0
    %v621 = vadd.f32 0.0, %v620
    %v622 = vpop.f32.mrb[0].mxu0
    %623 = vmatprep.mubr.bf16.mxu0 0
    %624 = vmatmul.mubr.bf16.gmra.mrb[0].mxu0 %v498
    %v625 = vpop.f32.mrb[0].mxu0
    %v626 = vadd.f32 0.0, %v625
    %v627 = vpop.f32.mrb[0].mxu0
    %v628 = vpop.f32.mrb[0].mxu0
    %v629 = vadd.f32 0.0, %v628
    %v630 = vpop.f32.mrb[0].mxu0
    %631 = vmatprep.mubr.bf16.mxu0 0
    %632 = vmatmul.mubr.bf16.gmra.mrb[0].mxu0 %v499
    %v633 = vpop.f32.mrb[0].mxu0
    %v634 = vadd.f32 0.0, %v633
    %v635 = vpop.f32.mrb[0].mxu0
    %v636 = vpop.f32.mrb[0].mxu0
    %v637 = vadd.f32 0.0, %v636
    %v638 = vpop.f32.mrb[0].mxu0
    %639 = vmatprep.mubr.bf16.mxu0 0
    %640 = vmatmul.mubr.bf16.gmra.mrb[0].mxu0 %v500
    %v641 = vpop.f32.mrb[0].mxu0
    %v642 = vadd.f32 0.0, %v641
    %v643 = vpop.f32.mrb[0].mxu0
    %v644 = vpop.f32.mrb[0].mxu0
    %v645 = vadd.f32 0.0, %v644
    %v646 = vpop.f32.mrb[0].mxu0
    %647 = vmatprep.mubr.bf16.mxu0 0
    %648 = vmatmul.mubr.bf16.gmra.mrb[0].mxu0 %v501
    %v649 = vpop.f32.mrb[0].mxu0
    %v650 = vadd.f32 0.0, %v649
    %v651 = vpop.f32.mrb[0].mxu0
    %v652 = vpop.f32.mrb[0].mxu0
    %v653 = vadd.f32 0.0, %v652
    %v654 = vpop.f32.mrb[0].mxu0
    %655 = vmatprep.mubr.bf16.mxu0 0
    %656 = vmatmul.mubr.bf16.gmra.mrb[0].mxu0 %v502
    %v657 = vpop.f32.mrb[0].mxu0
    %v658 = vadd.f32 0.0, %v657
    %v659 = vpop.f32.mrb[0].mxu0
    %v660 = vpop.f32.mrb[0].mxu0
    %v661 = vadd.f32 0.0, %v660
    %v662 = vpop.f32.mrb[0].mxu0
    %663 = vdwg.mxu0
    %v664 = vpack.c.bf16 %v605, %v602
    %v665 = vpack.c.bf16 %v613, %v610
    %v666 = vpack.c.bf16 %v621, %v618
    %v667 = vpack.c.bf16 %v629, %v626
    %v668 = vpack.c.bf16 %v637, %v634
    %v669 = vpack.c.bf16 %v645, %v642
    %v670 = vpack.c.bf16 %v653, %v650
    %v671 = vpack.c.bf16 %v661, %v658
    %672 = vmatprep.subr.bf16.mxu0 0
    %673 = vmatpush1.bf16.msra.mxu0 %v664
    %674 = vmatprep.subr.bf16.mxu0 0
    %675 = vmatpush1.bf16.msra.mxu0 %v665
    %676 = vmatprep.subr.bf16.mxu0 0
    %677 = vmatpush1.bf16.msra.mxu0 %v666
    %678 = vmatprep.subr.bf16.mxu0 0
    %679 = vmatpush1.bf16.msra.mxu0 %v667
    %680 = vmatprep.subr.bf16.mxu0 0
    %681 = vmatpush1.bf16.msra.mxu0 %v668
    %682 = vmatprep.subr.bf16.mxu0 0
    %683 = vmatpush1.bf16.msra.mxu0 %v669
    %684 = vmatprep.subr.bf16.mxu0 0
    %685 = vmatpush1.bf16.msra.mxu0 %v670
    %686 = vmatprep.subr.bf16.mxu0 0
    %687 = vmatpush1.bf16.msra.mxu0 %v671
    %688 = vmatprep.subr.bf16.mxu0 0
    %689 = vmatpush1.bf16.msra.mxu0 0
    %690 = vmatprep.subr.bf16.mxu0 0
    %691 = vmatpush1.bf16.msra.mxu0 0
    %692 = vmatprep.subr.bf16.mxu0 0
    %693 = vmatpush1.bf16.msra.mxu0 0
    %694 = vmatprep.subr.bf16.mxu0 0
    %695 = vmatpush1.bf16.msra.mxu0 0
    %696 = vmatprep.subr.bf16.mxu0 0
    %697 = vmatpush1.bf16.msra.mxu0 0
    %698 = vmatprep.subr.bf16.mxu0 0
    %699 = vmatpush1.bf16.msra.mxu0 0
    %700 = vmatprep.subr.bf16.mxu0 0
    %701 = vmatpush1.bf16.msra.mxu0 0
    %702 = vmatprep.subr.bf16.mxu0 0
    %703 = vmatpush1.bf16.msra.mxu0 0
    %704 = vmatprep.mubr.bf16.mxu0 0
    %705 = vmatmul.mubr.bf16.gmra.mrb[0].mxu0 %v366
    %v706 = vpop.f32.mrb[0].mxu0
    %v707 = vadd.f32 0.0, %v706
    %v708 = vpop.f32.mrb[0].mxu0
    %v709 = vpop.f32.mrb[0].mxu0
    %v710 = vadd.f32 0.0, %v709
    %v711 = vpop.f32.mrb[0].mxu0
    %712 = vmatprep.mubr.bf16.mxu0 0
    %713 = vmatmul.mubr.bf16.gmra.mrb[0].mxu0 %v367
    %v714 = vpop.f32.mrb[0].mxu0
    %v715 = vadd.f32 0.0, %v714
    %v716 = vpop.f32.mrb[0].mxu0
    %v717 = vpop.f32.mrb[0].mxu0
    %v718 = vadd.f32 0.0, %v717
    %v719 = vpop.f32.mrb[0].mxu0
    %720 = vmatprep.mubr.bf16.mxu0 0
    %721 = vmatmul.mubr.bf16.gmra.mrb[0].mxu0 %v368
    %v722 = vpop.f32.mrb[0].mxu0
    %v723 = vadd.f32 0.0, %v722
    %v724 = vpop.f32.mrb[0].mxu0
    %v725 = vpop.f32.mrb[0].mxu0
    %v726 = vadd.f32 0.0, %v725
    %v727 = vpop.f32.mrb[0].mxu0
    %728 = vmatprep.mubr.bf16.mxu0 0
    %729 = vmatmul.mubr.bf16.gmra.mrb[0].mxu0 %v369
    %v730 = vpop.f32.mrb[0].mxu0
    %v731 = vadd.f32 0.0, %v730
    %v732 = vpop.f32.mrb[0].mxu0
    %v733 = vpop.f32.mrb[0].mxu0
    %v734 = vadd.f32 0.0, %v733
    %v735 = vpop.f32.mrb[0].mxu0
    %736 = vmatprep.mubr.bf16.mxu0 0
    %737 = vmatmul.mubr.bf16.gmra.mrb[0].mxu0 %v370
    %v738 = vpop.f32.mrb[0].mxu0
    %v739 = vadd.f32 0.0, %v738
    %v740 = vpop.f32.mrb[0].mxu0
    %v741 = vpop.f32.mrb[0].mxu0
    %v742 = vadd.f32 0.0, %v741
    %v743 = vpop.f32.mrb[0].mxu0
    %744 = vmatprep.mubr.bf16.mxu0 0
    %745 = vmatmul.mubr.bf16.gmra.mrb[0].mxu0 %v371
    %v746 = vpop.f32.mrb[0].mxu0
    %v747 = vadd.f32 0.0, %v746
    %v748 = vpop.f32.mrb[0].mxu0
    %v749 = vpop.f32.mrb[0].mxu0
    %v750 = vadd.f32 0.0, %v749
    %v751 = vpop.f32.mrb[0].mxu0
    %752 = vmatprep.mubr.bf16.mxu0 0
    %753 = vmatmul.mubr.bf16.gmra.mrb[0].mxu0 %v372
    %v754 = vpop.f32.mrb[0].mxu0
    %v755 = vadd.f32 0.0, %v754
    %v756 = vpop.f32.mrb[0].mxu0
    %v757 = vpop.f32.mrb[0].mxu0
    %v758 = vadd.f32 0.0, %v757
    %v759 = vpop.f32.mrb[0].mxu0
    %760 = vmatprep.mubr.bf16.mxu0 0
    %761 = vmatmul.mubr.bf16.gmra.mrb[0].mxu0 %v373
    %v762 = vpop.f32.mrb[0].mxu0
    %v763 = vadd.f32 0.0, %v762
    %v764 = vpop.f32.mrb[0].mxu0
    %v765 = vpop.f32.mrb[0].mxu0
    %v766 = vadd.f32 0.0, %v765
    %v767 = vpop.f32.mrb[0].mxu0
    %768 = vdwg.mxu0
    %v769 = vmax.f32 %v707, 0.0
    %v770 = vmax.f32 %v710, 0.0
    %v771 = vmax.f32 %v715, 0.0
    %v772 = vmax.f32 %v718, 0.0
    %v773 = vmax.f32 %v723, 0.0
    %v774 = vmax.f32 %v726, 0.0
    %v775 = vmax.f32 %v731, 0.0
    %v776 = vmax.f32 %v734, 0.0
    %v777 = vmax.f32 %v739, 0.0
    %v778 = vmax.f32 %v742, 0.0
    %v779 = vmax.f32 %v747, 0.0
    %v780 = vmax.f32 %v750, 0.0
    %v781 = vmax.f32 %v755, 0.0
    %v782 = vmax.f32 %v758, 0.0
    %v783 = vmax.f32 %v763, 0.0
    %v784 = vmax.f32 %v766, 0.0
    %v785 = vadd.f32 %v479, %v769
    %v786 = vadd.f32 %v480, %v770
    %v787 = vadd.f32 %v481, %v771
    %v788 = vadd.f32 %v482, %v772
    %v789 = vadd.f32 %v483, %v773
    %v790 = vadd.f32 %v484, %v774
    %v791 = vadd.f32 %v485, %v775
    %v792 = vadd.f32 %v486, %v776
    %v793 = vadd.f32 %v487, %v777
    %v794 = vadd.f32 %v488, %v778
    %v795 = vadd.f32 %v489, %v779
    %v796 = vadd.f32 %v490, %v780
    %v797 = vadd.f32 %v491, %v781
    %v798 = vadd.f32 %v492, %v782
    %v799 = vadd.f32 %v493, %v783
    %v800 = vadd.f32 %v494, %v784
    %v801 = vpack.c.bf16 %v786, %v785
    %v802 = vpack.c.bf16 %v788, %v787
    %v803 = vpack.c.bf16 %v790, %v789
    %v804 = vpack.c.bf16 %v792, %v791
    %v805 = vpack.c.bf16 %v794, %v793
    %v806 = vpack.c.bf16 %v796, %v795
    %v807 = vpack.c.bf16 %v798, %v797
    %v808 = vpack.c.bf16 %v800, %v799
    %v809 = vld [vmem:[#allocation7] sm:$0xff]
    %v810 = vld [vmem:[#allocation7 + $0xc] sm:$0xff]
    %v811 = vld [vmem:[#allocation7 + $0x18] sm:$0xff]
    %v812 = vld [vmem:[#allocation7 + $0x24] sm:$0xff]
    %v813 = vld [vmem:[#allocation7 + $0x30] sm:$0xff]
    %v814 = vld [vmem:[#allocation7 + $0x3c] sm:$0xff]
    %v815 = vld [vmem:[#allocation7 + $0x48] sm:$0xff]
    %v816 = vld [vmem:[#allocation7 + $0x54] sm:$0xff]
    %v817 = vld [vmem:[#allocation7 + $0x60] sm:$0xff]
    %v818 = vld [vmem:[#allocation7 + $0x6c] sm:$0xff]
    %v819 = vld [vmem:[#allocation7 + $0x78] sm:$0xff]
    %v820 = vld [vmem:[#allocation7 + $0x84] sm:$0xff]
    %v821 = vld [vmem:[#allocation7 + $0x90] sm:$0xff]
    %v822 = vld [vmem:[#allocation7 + $0x9c] sm:$0xff]
    %v823 = vld [vmem:[#allocation7 + $0xa8] sm:$0xff]
    %v824 = vld [vmem:[#allocation7 + $0xb4] sm:$0xff]
    %v825 = vld [vmem:[%s6] sm:$0x3]
    %v827 = vlaneseq
    %v828 = vshrl.u32 %v827, 7
    %v829 = vsub.s32 0, %v828
    %v830 = vrot.slane %v825, %v829
    %v831 = vlaneseq
    %v832 = vshrl.u32 %v831, 7
    %v833 = vsub.s32 1, %v832
    %v834 = vrot.slane %v825, %v833
    %v853 = vunpack.c.l.b16 %v809
    %v854 = vunpack.c.h.b16 %v809
    %v855 = vunpack.c.l.b16 %v810
    %v856 = vunpack.c.h.b16 %v810
    %v857 = vunpack.c.l.b16 %v811
    %v858 = vunpack.c.h.b16 %v811
    %v859 = vunpack.c.l.b16 %v812
    %v860 = vunpack.c.h.b16 %v812
    %v861 = vunpack.c.l.b16 %v813
    %v862 = vunpack.c.h.b16 %v813
    %v863 = vunpack.c.l.b16 %v814
    %v864 = vunpack.c.h.b16 %v814
    %v865 = vunpack.c.l.b16 %v815
    %v866 = vunpack.c.h.b16 %v815
    %v867 = vunpack.c.l.b16 %v816
    %v868 = vunpack.c.h.b16 %v816
    %v869 = vunpack.c.l.b16 %v817
    %v870 = vunpack.c.h.b16 %v817
    %v871 = vunpack.c.l.b16 %v818
    %v872 = vunpack.c.h.b16 %v818
    %v873 = vunpack.c.l.b16 %v819
    %v874 = vunpack.c.h.b16 %v819
    %v875 = vunpack.c.l.b16 %v820
    %v876 = vunpack.c.h.b16 %v820
    %v877 = vunpack.c.l.b16 %v821
    %v878 = vunpack.c.h.b16 %v821
    %v879 = vunpack.c.l.b16 %v822
    %v880 = vunpack.c.h.b16 %v822
    %v881 = vunpack.c.l.b16 %v823
    %v882 = vunpack.c.h.b16 %v823
    %v883 = vunpack.c.l.b16 %v824
    %v884 = vunpack.c.h.b16 %v824
    %v885 = vpack.c.b16 %v855, %v853
    %v886 = vpack.c.b16 %v856, %v854
    %v887 = vpack.c.b16 %v859, %v857
    %v888 = vpack.c.b16 %v860, %v858
    %v889 = vpack.c.b16 %v863, %v861
    %v890 = vpack.c.b16 %v864, %v862
    %v891 = vpack.c.b16 %v867, %v865
    %v892 = vpack.c.b16 %v868, %v866
    %v893 = vpack.c.b16 %v871, %v869
    %v894 = vpack.c.b16 %v872, %v870
    %v895 = vpack.c.b16 %v875, %v873
    %v896 = vpack.c.b16 %v876, %v874
    %v897 = vpack.c.b16 %v879, %v877
    %v898 = vpack.c.b16 %v880, %v878
    %v899 = vpack.c.b16 %v883, %v881
    %v900 = vpack.c.b16 %v884, %v882
    %917 = vmatprep.subr.bf16.mxu0 %v886
    %918 = vmatpush1.bf16.msra.mxu0 %v885
    %919 = vmatprep.subr.bf16.mxu0 %v888
    %920 = vmatpush1.bf16.msra.mxu0 %v887
    %921 = vmatprep.subr.bf16.mxu0 %v890
    %922 = vmatpush1.bf16.msra.mxu0 %v889
    %923 = vmatprep.subr.bf16.mxu0 %v892
    %924 = vmatpush1.bf16.msra.mxu0 %v891
    %925 = vmatprep.subr.bf16.mxu0 %v894
    %926 = vmatpush1.bf16.msra.mxu0 %v893
    %927 = vmatprep.subr.bf16.mxu0 %v896
    %928 = vmatpush1.bf16.msra.mxu0 %v895
    %929 = vmatprep.subr.bf16.mxu0 %v898
    %930 = vmatpush1.bf16.msra.mxu0 %v897
    %931 = vmatprep.subr.bf16.mxu0 %v900
    %932 = vmatpush1.bf16.msra.mxu0 %v899
    %933 = vmatprep.subr.bf16.mxu0 0
    %934 = vmatpush1.bf16.msra.mxu0 0
    %935 = vmatprep.subr.bf16.mxu0 0
    %936 = vmatpush1.bf16.msra.mxu0 0
    %937 = vmatprep.subr.bf16.mxu0 0
    %938 = vmatpush1.bf16.msra.mxu0 0
    %939 = vmatprep.subr.bf16.mxu0 0
    %940 = vmatpush1.bf16.msra.mxu0 0
    %941 = vmatprep.subr.bf16.mxu0 0
    %942 = vmatpush1.bf16.msra.mxu0 0
    %943 = vmatprep.subr.bf16.mxu0 0
    %944 = vmatpush1.bf16.msra.mxu0 0
    %945 = vmatprep.subr.bf16.mxu0 0
    %946 = vmatpush1.bf16.msra.mxu0 0
    %947 = vmatprep.subr.bf16.mxu0 0
    %948 = vmatpush1.bf16.msra.mxu0 0
    %949 = vmatprep.mubr.bf16.mxu0 0
    %950 = vmatmul.mubr.bf16.gmra.mrb[0].mxu0 %v801
    %v951 = vpop.f32.mrb[0].mxu0
    %v952 = vadd.f32 %v830, %v951
    %v953 = vpop.f32.mrb[0].mxu0
    %v954 = vadd.f32 %v834, %v953
    %v955 = vpop.f32.mrb[0].mxu0
    %v956 = vadd.f32 %v830, %v955
    %v957 = vpop.f32.mrb[0].mxu0
    %v958 = vadd.f32 %v834, %v957
    %959 = vmatprep.mubr.bf16.mxu0 0
    %960 = vmatmul.mubr.bf16.gmra.mrb[0].mxu0 %v802
    %v961 = vpop.f32.mrb[0].mxu0
    %v962 = vadd.f32 %v830, %v961
    %v963 = vpop.f32.mrb[0].mxu0
    %v964 = vadd.f32 %v834, %v963
    %v965 = vpop.f32.mrb[0].mxu0
    %v966 = vadd.f32 %v830, %v965
    %v967 = vpop.f32.mrb[0].mxu0
    %v968 = vadd.f32 %v834, %v967
    %969 = vmatprep.mubr.bf16.mxu0 0
    %970 = vmatmul.mubr.bf16.gmra.mrb[0].mxu0 %v803
    %v971 = vpop.f32.mrb[0].mxu0
    %v972 = vadd.f32 %v830, %v971
    %v973 = vpop.f32.mrb[0].mxu0
    %v974 = vadd.f32 %v834, %v973
    %v975 = vpop.f32.mrb[0].mxu0
    %v976 = vadd.f32 %v830, %v975
    %v977 = vpop.f32.mrb[0].mxu0
    %v978 = vadd.f32 %v834, %v977
    %979 = vmatprep.mubr.bf16.mxu0 0
    %980 = vmatmul.mubr.bf16.gmra.mrb[0].mxu0 %v804
    %v981 = vpop.f32.mrb[0].mxu0
    %v982 = vadd.f32 %v830, %v981
    %v983 = vpop.f32.mrb[0].mxu0
    %v984 = vadd.f32 %v834, %v983
    %v985 = vpop.f32.mrb[0].mxu0
    %v986 = vadd.f32 %v830, %v985
    %v987 = vpop.f32.mrb[0].mxu0
    %v988 = vadd.f32 %v834, %v987
    %989 = vmatprep.mubr.bf16.mxu0 0
    %990 = vmatmul.mubr.bf16.gmra.mrb[0].mxu0 %v805
    %v991 = vpop.f32.mrb[0].mxu0
    %v992 = vadd.f32 %v830, %v991
    %v993 = vpop.f32.mrb[0].mxu0
    %v994 = vadd.f32 %v834, %v993
    %v995 = vpop.f32.mrb[0].mxu0
    %v996 = vadd.f32 %v830, %v995
    %v997 = vpop.f32.mrb[0].mxu0
    %v998 = vadd.f32 %v834, %v997
    %999 = vmatprep.mubr.bf16.mxu0 0
    %1000 = vmatmul.mubr.bf16.gmra.mrb[0].mxu0 %v806
    %v1001 = vpop.f32.mrb[0].mxu0
    %v1002 = vadd.f32 %v830, %v1001
    %v1003 = vpop.f32.mrb[0].mxu0
    %v1004 = vadd.f32 %v834, %v1003
    %v1005 = vpop.f32.mrb[0].mxu0
    %v1006 = vadd.f32 %v830, %v1005
    %v1007 = vpop.f32.mrb[0].mxu0
    %v1008 = vadd.f32 %v834, %v1007
    %1009 = vmatprep.mubr.bf16.mxu0 0
    %1010 = vmatmul.mubr.bf16.gmra.mrb[0].mxu0 %v807
    %v1011 = vpop.f32.mrb[0].mxu0
    %v1012 = vadd.f32 %v830, %v1011
    %v1013 = vpop.f32.mrb[0].mxu0
    %v1014 = vadd.f32 %v834, %v1013
    %v1015 = vpop.f32.mrb[0].mxu0
    %v1016 = vadd.f32 %v830, %v1015
    %v1017 = vpop.f32.mrb[0].mxu0
    %v1018 = vadd.f32 %v834, %v1017
    %1019 = vmatprep.mubr.bf16.mxu0 0
    %1020 = vmatmul.mubr.bf16.gmra.mrb[0].mxu0 %v808
    %v1021 = vpop.f32.mrb[0].mxu0
    %v1022 = vadd.f32 %v830, %v1021
    %v1023 = vpop.f32.mrb[0].mxu0
    %v1024 = vadd.f32 %v834, %v1023
    %v1025 = vpop.f32.mrb[0].mxu0
    %v1026 = vadd.f32 %v830, %v1025
    %v1027 = vpop.f32.mrb[0].mxu0
    %v1028 = vadd.f32 %v834, %v1027
    %1029 = vdwg.mxu0
    %v1030 = vmax.f32 %v952, 0.0
    %v1031 = vmax.f32 %v956, 0.0
    %v1032 = vmax.f32 %v962, 0.0
    %v1033 = vmax.f32 %v966, 0.0
    %v1034 = vmax.f32 %v972, 0.0
    %v1035 = vmax.f32 %v976, 0.0
    %v1036 = vmax.f32 %v982, 0.0
    %v1037 = vmax.f32 %v986, 0.0
    %v1038 = vmax.f32 %v992, 0.0
    %v1039 = vmax.f32 %v996, 0.0
    %v1040 = vmax.f32 %v1002, 0.0
    %v1041 = vmax.f32 %v1006, 0.0
    %v1042 = vmax.f32 %v1012, 0.0
    %v1043 = vmax.f32 %v1016, 0.0
    %v1044 = vmax.f32 %v1022, 0.0
    %v1045 = vmax.f32 %v1026, 0.0
    %v1046 = vxor.u32 %v954, 2147483648
    %v1047 = vxor.u32 %v958, 2147483648
    %v1048 = vxor.u32 %v964, 2147483648
    %v1049 = vxor.u32 %v968, 2147483648
    %v1050 = vxor.u32 %v974, 2147483648
    %v1051 = vxor.u32 %v978, 2147483648
    %v1052 = vxor.u32 %v984, 2147483648
    %v1053 = vxor.u32 %v988, 2147483648
    %v1054 = vxor.u32 %v994, 2147483648
    %v1055 = vxor.u32 %v998, 2147483648
    %v1056 = vxor.u32 %v1004, 2147483648
    %v1057 = vxor.u32 %v1008, 2147483648
    %v1058 = vxor.u32 %v1014, 2147483648
    %v1059 = vxor.u32 %v1018, 2147483648
    %v1060 = vxor.u32 %v1024, 2147483648
    %v1061 = vxor.u32 %v1028, 2147483648
    %v1062 = vmul.f32 %v1046, 1.442695
    %v1063 = vpow.pop %v1062
    %v1064 = vmul.f32 %v1047, 1.442695
    %v1065 = vpow.pop %v1064
    %v1066 = vmul.f32 %v1048, 1.442695
    %v1067 = vpow.pop %v1066
    %v1068 = vmul.f32 %v1049, 1.442695
    %v1069 = vpow.pop %v1068
    %v1070 = vmul.f32 %v1050, 1.442695
    %v1071 = vpow.pop %v1070
    %v1072 = vmul.f32 %v1051, 1.442695
    %v1073 = vpow.pop %v1072
    %v1074 = vmul.f32 %v1052, 1.442695
    %v1075 = vpow.pop %v1074
    %v1076 = vmul.f32 %v1053, 1.442695
    %v1077 = vpow.pop %v1076
    %v1078 = vmul.f32 %v1054, 1.442695
    %v1079 = vpow.pop %v1078
    %v1080 = vmul.f32 %v1055, 1.442695
    %v1081 = vpow.pop %v1080
    %v1082 = vmul.f32 %v1056, 1.442695
    %v1083 = vpow.pop %v1082
    %v1084 = vmul.f32 %v1057, 1.442695
    %v1085 = vpow.pop %v1084
    %v1086 = vmul.f32 %v1058, 1.442695
    %v1087 = vpow.pop %v1086
    %v1088 = vmul.f32 %v1059, 1.442695
    %v1089 = vpow.pop %v1088
    %v1090 = vmul.f32 %v1060, 1.442695
    %v1091 = vpow.pop %v1090
    %v1092 = vmul.f32 %v1061, 1.442695
    %v1093 = vpow.pop %v1092
    %v1094 = vadd.f32 %v1063, 1.0
    %v1095 = vadd.f32 %v1065, 1.0
    %v1096 = vadd.f32 %v1067, 1.0
    %v1097 = vadd.f32 %v1069, 1.0
    %v1098 = vadd.f32 %v1071, 1.0
    %v1099 = vadd.f32 %v1073, 1.0
    %v1100 = vadd.f32 %v1075, 1.0
    %v1101 = vadd.f32 %v1077, 1.0
    %v1102 = vadd.f32 %v1079, 1.0
    %v1103 = vadd.f32 %v1081, 1.0
    %v1104 = vadd.f32 %v1083, 1.0
    %v1105 = vadd.f32 %v1085, 1.0
    %v1106 = vadd.f32 %v1087, 1.0
    %v1107 = vadd.f32 %v1089, 1.0
    %v1108 = vadd.f32 %v1091, 1.0
    %v1109 = vadd.f32 %v1093, 1.0
    %v1110 = vrcp.pop %v1094
    %v1111 = vmul.f32 1.0, %v1110
    %v1112 = vrcp.pop %v1095
    %v1113 = vmul.f32 1.0, %v1112
    %v1114 = vrcp.pop %v1096
    %v1115 = vmul.f32 1.0, %v1114
    %v1116 = vrcp.pop %v1097
    %v1117 = vmul.f32 1.0, %v1116
    %v1118 = vrcp.pop %v1098
    %v1119 = vmul.f32 1.0, %v1118
    %v1120 = vrcp.pop %v1099
    %v1121 = vmul.f32 1.0, %v1120
    %v1122 = vrcp.pop %v1100
    %v1123 = vmul.f32 1.0, %v1122
    %v1124 = vrcp.pop %v1101
    %v1125 = vmul.f32 1.0, %v1124
    %v1126 = vrcp.pop %v1102
    %v1127 = vmul.f32 1.0, %v1126
    %v1128 = vrcp.pop %v1103
    %v1129 = vmul.f32 1.0, %v1128
    %v1130 = vrcp.pop %v1104
    %v1131 = vmul.f32 1.0, %v1130
    %v1132 = vrcp.pop %v1105
    %v1133 = vmul.f32 1.0, %v1132
    %v1134 = vrcp.pop %v1106
    %v1135 = vmul.f32 1.0, %v1134
    %v1136 = vrcp.pop %v1107
    %v1137 = vmul.f32 1.0, %v1136
    %v1138 = vrcp.pop %v1108
    %v1139 = vmul.f32 1.0, %v1138
    %v1140 = vrcp.pop %v1109
    %v1141 = vmul.f32 1.0, %v1140
    %v1142 = vmul.f32 %v1111, %v1030
    %v1143 = vmul.f32 %v1113, %v1031
    %v1144 = vmul.f32 %v1115, %v1032
    %v1145 = vmul.f32 %v1117, %v1033
    %v1146 = vmul.f32 %v1119, %v1034
    %v1147 = vmul.f32 %v1121, %v1035
    %v1148 = vmul.f32 %v1123, %v1036
    %v1149 = vmul.f32 %v1125, %v1037
    %v1150 = vmul.f32 %v1127, %v1038
    %v1151 = vmul.f32 %v1129, %v1039
    %v1152 = vmul.f32 %v1131, %v1040
    %v1153 = vmul.f32 %v1133, %v1041
    %v1154 = vmul.f32 %v1135, %v1042
    %v1155 = vmul.f32 %v1137, %v1043
    %v1156 = vmul.f32 %v1139, %v1044
    %v1157 = vmul.f32 %v1141, %v1045
    %1159 = vset.pattern.permute.xlu0 0
    %1160 = vperm.xlu0 %1159, %v101
    %v1161 = vpop.permute.xlu0 %1160
    %1164 = vset.pattern.permute.xlu0 0
    %1165 = vperm.xlu0 %1164, %v102
    %v1166 = vpop.permute.xlu0 %1165
    %1169 = vset.pattern.permute.xlu0 0
    %1170 = vperm.xlu0 %1169, %v103
    %v1171 = vpop.permute.xlu0 %1170
    %1174 = vset.pattern.permute.xlu0 0
    %1175 = vperm.xlu0 %1174, %v104
    %v1176 = vpop.permute.xlu0 %1175
    %1179 = vset.pattern.permute.xlu0 0
    %1180 = vperm.xlu0 %1179, %v105
    %v1181 = vpop.permute.xlu0 %1180
    %1184 = vset.pattern.permute.xlu0 0
    %1185 = vperm.xlu0 %1184, %v106
    %v1186 = vpop.permute.xlu0 %1185
    %1189 = vset.pattern.permute.xlu0 0
    %1190 = vperm.xlu0 %1189, %v107
    %v1191 = vpop.permute.xlu0 %1190
    %1194 = vset.pattern.permute.xlu0 0
    %1195 = vperm.xlu0 %1194, %v108
    %v1196 = vpop.permute.xlu0 %1195
    %1199 = vset.pattern.permute.xlu0 0
    %1200 = vperm.xlu0 %1199, %v109
    %v1201 = vpop.permute.xlu0 %1200
    %1204 = vset.pattern.permute.xlu0 0
    %1205 = vperm.xlu0 %1204, %v110
    %v1206 = vpop.permute.xlu0 %1205
    %1209 = vset.pattern.permute.xlu0 0
    %1210 = vperm.xlu0 %1209, %v111
    %v1211 = vpop.permute.xlu0 %1210
    %1214 = vset.pattern.permute.xlu0 0
    %1215 = vperm.xlu0 %1214, %v112
    %v1216 = vpop.permute.xlu0 %1215
    %1219 = vset.pattern.permute.xlu0 0
    %1220 = vperm.xlu0 %1219, %v113
    %v1221 = vpop.permute.xlu0 %1220
    %1224 = vset.pattern.permute.xlu0 0
    %1225 = vperm.xlu0 %1224, %v114
    %v1226 = vpop.permute.xlu0 %1225
    %1229 = vset.pattern.permute.xlu0 0
    %1230 = vperm.xlu0 %1229, %v115
    %v1231 = vpop.permute.xlu0 %1230
    %1234 = vset.pattern.permute.xlu0 0
    %1235 = vperm.xlu0 %1234, %v116
    %v1236 = vpop.permute.xlu0 %1235
    %v1238 = vmul.f32 %v1142, %v1161
    %v1239 = vmul.f32 %v1143, %v1166
    %v1240 = vmul.f32 %v1144, %v1171
    %v1241 = vmul.f32 %v1145, %v1176
    %v1242 = vmul.f32 %v1146, %v1181
    %v1243 = vmul.f32 %v1147, %v1186
    %v1244 = vmul.f32 %v1148, %v1191
    %v1245 = vmul.f32 %v1149, %v1196
    %v1246 = vmul.f32 %v1150, %v1201
    %v1247 = vmul.f32 %v1151, %v1206
    %v1248 = vmul.f32 %v1152, %v1211
    %v1249 = vmul.f32 %v1153, %v1216
    %v1250 = vmul.f32 %v1154, %v1221
    %v1251 = vmul.f32 %v1155, %v1226
    %v1252 = vmul.f32 %v1156, %v1231
    %v1253 = vmul.f32 %v1157, %v1236
    %v1254 = vadd.f32 %v1238, %v1239
    %v1255 = vrot.slane %v1254, 4
    %v1256 = vadd.f32 %v1254, %v1255
    %v1257 = vrot.slane %v1256, 2
    %v1258 = vadd.f32 %v1256, %v1257
    %v1259 = vrot.slane %v1258, 1
    %v1260 = vadd.f32 %v1258, %v1259
    %v1261 = vadd.f32 %v1240, %v1241
    %v1262 = vrot.slane %v1261, 4
    %v1263 = vadd.f32 %v1261, %v1262
    %v1264 = vrot.slane %v1263, 2
    %v1265 = vadd.f32 %v1263, %v1264
    %v1266 = vrot.slane %v1265, 1
    %v1267 = vadd.f32 %v1265, %v1266
    %v1268 = vadd.f32 %v1242, %v1243
    %v1269 = vrot.slane %v1268, 4
    %v1270 = vadd.f32 %v1268, %v1269
    %v1271 = vrot.slane %v1270, 2
    %v1272 = vadd.f32 %v1270, %v1271
    %v1273 = vrot.slane %v1272, 1
    %v1274 = vadd.f32 %v1272, %v1273
    %v1275 = vadd.f32 %v1244, %v1245
    %v1276 = vrot.slane %v1275, 4
    %v1277 = vadd.f32 %v1275, %v1276
    %v1278 = vrot.slane %v1277, 2
    %v1279 = vadd.f32 %v1277, %v1278
    %v1280 = vrot.slane %v1279, 1
    %v1281 = vadd.f32 %v1279, %v1280
    %v1282 = vadd.f32 %v1246, %v1247
    %v1283 = vrot.slane %v1282, 4
    %v1284 = vadd.f32 %v1282, %v1283
    %v1285 = vrot.slane %v1284, 2
    %v1286 = vadd.f32 %v1284, %v1285
    %v1287 = vrot.slane %v1286, 1
    %v1288 = vadd.f32 %v1286, %v1287
    %v1289 = vadd.f32 %v1248, %v1249
    %v1290 = vrot.slane %v1289, 4
    %v1291 = vadd.f32 %v1289, %v1290
    %v1292 = vrot.slane %v1291, 2
    %v1293 = vadd.f32 %v1291, %v1292
    %v1294 = vrot.slane %v1293, 1
    %v1295 = vadd.f32 %v1293, %v1294
    %v1296 = vadd.f32 %v1250, %v1251
    %v1297 = vrot.slane %v1296, 4
    %v1298 = vadd.f32 %v1296, %v1297
    %v1299 = vrot.slane %v1298, 2
    %v1300 = vadd.f32 %v1298, %v1299
    %v1301 = vrot.slane %v1300, 1
    %v1302 = vadd.f32 %v1300, %v1301
    %v1303 = vadd.f32 %v1252, %v1253
    %v1304 = vrot.slane %v1303, 4
    %v1305 = vadd.f32 %v1303, %v1304
    %v1306 = vrot.slane %v1305, 2
    %v1307 = vadd.f32 %v1305, %v1306
    %v1308 = vrot.slane %v1307, 1
    %v1309 = vadd.f32 %v1307, %v1308
    %v1310 = vmax.f32 %v1238, %v1239
    %v1311 = vrot.slane %v1310, 4
    %v1312 = vmax.f32 %v1310, %v1311
    %v1313 = vrot.slane %v1312, 2
    %v1314 = vmax.f32 %v1312, %v1313
    %v1315 = vrot.slane %v1314, 1
    %v1316 = vmax.f32 %v1314, %v1315
    %v1317 = vmax.f32 %v1240, %v1241
    %v1318 = vrot.slane %v1317, 4
    %v1319 = vmax.f32 %v1317, %v1318
    %v1320 = vrot.slane %v1319, 2
    %v1321 = vmax.f32 %v1319, %v1320
    %v1322 = vrot.slane %v1321, 1
    %v1323 = vmax.f32 %v1321, %v1322
    %v1324 = vmax.f32 %v1242, %v1243
    %v1325 = vrot.slane %v1324, 4
    %v1326 = vmax.f32 %v1324, %v1325
    %v1327 = vrot.slane %v1326, 2
    %v1328 = vmax.f32 %v1326, %v1327
    %v1329 = vrot.slane %v1328, 1
    %v1330 = vmax.f32 %v1328, %v1329
    %v1331 = vmax.f32 %v1244, %v1245
    %v1332 = vrot.slane %v1331, 4
    %v1333 = vmax.f32 %v1331, %v1332
    %v1334 = vrot.slane %v1333, 2
    %v1335 = vmax.f32 %v1333, %v1334
    %v1336 = vrot.slane %v1335, 1
    %v1337 = vmax.f32 %v1335, %v1336
    %v1338 = vmax.f32 %v1246, %v1247
    %v1339 = vrot.slane %v1338, 4
    %v1340 = vmax.f32 %v1338, %v1339
    %v1341 = vrot.slane %v1340, 2
    %v1342 = vmax.f32 %v1340, %v1341
    %v1343 = vrot.slane %v1342, 1
    %v1344 = vmax.f32 %v1342, %v1343
    %v1345 = vmax.f32 %v1248, %v1249
    %v1346 = vrot.slane %v1345, 4
    %v1347 = vmax.f32 %v1345, %v1346
    %v1348 = vrot.slane %v1347, 2
    %v1349 = vmax.f32 %v1347, %v1348
    %v1350 = vrot.slane %v1349, 1
    %v1351 = vmax.f32 %v1349, %v1350
    %v1352 = vmax.f32 %v1250, %v1251
    %v1353 = vrot.slane %v1352, 4
    %v1354 = vmax.f32 %v1352, %v1353
    %v1355 = vrot.slane %v1354, 2
    %v1356 = vmax.f32 %v1354, %v1355
    %v1357 = vrot.slane %v1356, 1
    %v1358 = vmax.f32 %v1356, %v1357
    %v1359 = vmax.f32 %v1252, %v1253
    %v1360 = vrot.slane %v1359, 4
    %v1361 = vmax.f32 %v1359, %v1360
    %v1362 = vrot.slane %v1361, 2
    %v1363 = vmax.f32 %v1361, %v1362
    %v1364 = vrot.slane %v1363, 1
    %v1365 = vmax.f32 %v1363, %v1364
    %v1366 = vmul.f32 %v1260, %v1316
    %v1367 = vmul.f32 %v1267, %v1323
    %v1368 = vmul.f32 %v1274, %v1330
    %v1369 = vmul.f32 %v1281, %v1337
    %v1370 = vmul.f32 %v1288, %v1344
    %v1371 = vmul.f32 %v1295, %v1351
    %v1372 = vmul.f32 %v1302, %v1358
    %v1373 = vmul.f32 %v1309, %v1365
    %v1374 = vld [vmem:[#allocation7 + $0x8] sm:$0xf]
    %v1375 = vld [vmem:[#allocation7 + $0x14] sm:$0xf]
    %v1376 = vld [vmem:[#allocation7 + $0x20] sm:$0xf]
    %v1377 = vld [vmem:[#allocation7 + $0x2c] sm:$0xf]
    %v1378 = vld [vmem:[#allocation7 + $0x38] sm:$0xf]
    %v1379 = vld [vmem:[#allocation7 + $0x44] sm:$0xf]
    %v1380 = vld [vmem:[#allocation7 + $0x50] sm:$0xf]
    %v1381 = vld [vmem:[#allocation7 + $0x5c] sm:$0xf]
    %v1382 = vld [vmem:[#allocation7 + $0x68] sm:$0xf]
    %v1383 = vld [vmem:[#allocation7 + $0x74] sm:$0xf]
    %v1384 = vld [vmem:[#allocation7 + $0x80] sm:$0xf]
    %v1385 = vld [vmem:[#allocation7 + $0x8c] sm:$0xf]
    %v1386 = vld [vmem:[#allocation7 + $0x98] sm:$0xf]
    %v1387 = vld [vmem:[#allocation7 + $0xa4] sm:$0xf]
    %v1388 = vld [vmem:[#allocation7 + $0xb0] sm:$0xf]
    %v1389 = vld [vmem:[#allocation7 + $0xbc] sm:$0xf]
    %v1390 = vld [vmem:[%s6 + $0x2] sm:$0x1]
    %v1391 = vlaneseq
    %v1392 = vand.u32 %v1391, 127
    %vm1393 = vcmp.lt.s32.totalorder %v1392, 32
    %v1394 = vsel %vm1393, 1, 0
    %v1395 = vcvt.s32.f32 %v1394
    %v1396 = vpack.c.bf16 %v1366, %v1366
    %v1397 = vpack.c.bf16 %v1367, %v1367
    %v1398 = vpack.c.bf16 %v1368, %v1368
    %v1399 = vpack.c.bf16 %v1369, %v1369
    %v1400 = vpack.c.bf16 %v1370, %v1370
    %v1401 = vpack.c.bf16 %v1371, %v1371
    %v1402 = vpack.c.bf16 %v1372, %v1372
    %v1403 = vpack.c.bf16 %v1373, %v1373
    %v1404 = vmul.f32 %v1390, %v1395
    %v1406 = vlaneseq
    %v1407 = vshrl.u32 %v1406, 7
    %v1408 = vsub.s32 0, %v1407
    %v1409 = vrot.slane %v1404, %v1408
    %v1419 = vunpack.c.l.b16 %v1396
    %v1420 = vunpack.c.l.b16 %v1397
    %v1421 = vunpack.c.l.b16 %v1398
    %v1422 = vunpack.c.l.b16 %v1399
    %v1423 = vunpack.c.l.b16 %v1400
    %v1424 = vunpack.c.l.b16 %v1401
    %v1425 = vunpack.c.l.b16 %v1402
    %v1426 = vunpack.c.l.b16 %v1403
    %vm1427 = vcmask 1041409
    %v1428 = vsel %vm1427, %v1420, %v1419
    %vm1429 = vcmask 1042434
    %v1430 = vsel %vm1429, %v1421, %v1428
    %vm1431 = vcmask 1043459
    %v1432 = vsel %vm1431, %v1422, %v1430
    %vm1433 = vcmask 1044484
    %v1434 = vsel %vm1433, %v1423, %v1432
    %vm1435 = vcmask 1045509
    %v1436 = vsel %vm1435, %v1424, %v1434
    %vm1437 = vcmask 1046534
    %v1438 = vsel %vm1437, %v1425, %v1436
    %vm1439 = vcmask 1047559
    %v1440 = vsel %vm1439, %v1426, %v1438
    %v1441 = vpack.c.b16 %v1440, %v1440
    %v1459 = vunpack.c.l.b16 %v1374
    %v1460 = vunpack.c.l.b16 %v1375
    %v1461 = vunpack.c.l.b16 %v1376
    %v1462 = vunpack.c.l.b16 %v1377
    %v1463 = vunpack.c.l.b16 %v1378
    %v1464 = vunpack.c.l.b16 %v1379
    %v1465 = vunpack.c.l.b16 %v1380
    %v1466 = vunpack.c.l.b16 %v1381
    %v1467 = vunpack.c.l.b16 %v1382
    %v1468 = vunpack.c.l.b16 %v1383
    %v1469 = vunpack.c.l.b16 %v1384
    %v1470 = vunpack.c.l.b16 %v1385
    %v1471 = vunpack.c.l.b16 %v1386
    %v1472 = vunpack.c.l.b16 %v1387
    %v1473 = vunpack.c.l.b16 %v1388
    %v1474 = vunpack.c.l.b16 %v1389
    %v1475 = vpack.c.b16 %v1460, %v1459
    %v1476 = vpack.c.b16 %v1462, %v1461
    %v1477 = vpack.c.b16 %v1464, %v1463
    %v1478 = vpack.c.b16 %v1466, %v1465
    %v1479 = vpack.c.b16 %v1468, %v1467
    %v1480 = vpack.c.b16 %v1470, %v1469
    %v1481 = vpack.c.b16 %v1472, %v1471
    %v1482 = vpack.c.b16 %v1474, %v1473
    %1491 = vmatprep.subr.bf16.mxu0 0
    %1492 = vmatpush1.bf16.msra.mxu0 %v1475
    %1493 = vmatprep.subr.bf16.mxu0 0
    %1494 = vmatpush1.bf16.msra.mxu0 %v1476
    %1495 = vmatprep.subr.bf16.mxu0 0
    %1496 = vmatpush1.bf16.msra.mxu0 %v1477
    %1497 = vmatprep.subr.bf16.mxu0 0
    %1498 = vmatpush1.bf16.msra.mxu0 %v1478
    %1499 = vmatprep.subr.bf16.mxu0 0
    %1500 = vmatpush1.bf16.msra.mxu0 %v1479
    %1501 = vmatprep.subr.bf16.mxu0 0
    %1502 = vmatpush1.bf16.msra.mxu0 %v1480
    %1503 = vmatprep.subr.bf16.mxu0 0
    %1504 = vmatpush1.bf16.msra.mxu0 %v1481
    %1505 = vmatprep.subr.bf16.mxu0 0
    %1506 = vmatpush1.bf16.msra.mxu0 %v1482
    %1507 = vmatprep.subr.bf16.mxu0 0
    %1508 = vmatpush1.bf16.msra.mxu0 0
    %1509 = vmatprep.subr.bf16.mxu0 0
    %1510 = vmatpush1.bf16.msra.mxu0 0
    %1511 = vmatprep.subr.bf16.mxu0 0
    %1512 = vmatpush1.bf16.msra.mxu0 0
    %1513 = vmatprep.subr.bf16.mxu0 0
    %1514 = vmatpush1.bf16.msra.mxu0 0
    %1515 = vmatprep.subr.bf16.mxu0 0
    %1516 = vmatpush1.bf16.msra.mxu0 0
    %1517 = vmatprep.subr.bf16.mxu0 0
    %1518 = vmatpush1.bf16.msra.mxu0 0
    %1519 = vmatprep.subr.bf16.mxu0 0
    %1520 = vmatpush1.bf16.msra.mxu0 0
    %1521 = vmatprep.subr.bf16.mxu0 0
    %1522 = vmatpush1.bf16.msra.mxu0 0
    %1523 = vmatprep.mubr.bf16.mxu0 0
    %1524 = vmatmul.mubr.bf16.gmra.mrb[0].mxu0 %v1441
    %v1525 = vpop.f32.mrb[0].mxu0
    %v1526 = vadd.f32 %v1409, %v1525
    %v1527 = vpop.f32.mrb[0].mxu0
    %v1528 = vpop.f32.mrb[0].mxu0
    %v1529 = vpop.f32.mrb[0].mxu0
    %1530 = vdwg.mxu0
    %v1531 = vtanh.pop %v1526
    %v1532 = vmul.f32 %v1531, %v1395
    %v1533 = vpack.c.bf16 %v1532, %v1532
    %v1535 = vlaneseq
    %v1536 = vshrl.u32 %v1535, 7
    %v1537 = vsub.s32 0, %v1536
    %v1538 = vrot.slane %v1390, %v1537
    %1540 = vmatprep.subr.bf16.mxu0 0
    %1541 = vmatpush1.bf16.msra.mxu0 %v1475
    %1542 = vmatprep.subr.bf16.mxu0 0
    %1543 = vmatpush1.bf16.msra.mxu0 %v1476
    %1544 = vmatprep.subr.bf16.mxu0 0
    %1545 = vmatpush1.bf16.msra.mxu0 %v1477
    %1546 = vmatprep.subr.bf16.mxu0 0
    %1547 = vmatpush1.bf16.msra.mxu0 %v1478
    %1548 = vmatprep.subr.bf16.mxu0 0
    %1549 = vmatpush1.bf16.msra.mxu0 %v1479
    %1550 = vmatprep.subr.bf16.mxu0 0
    %1551 = vmatpush1.bf16.msra.mxu0 %v1480
    %1552 = vmatprep.subr.bf16.mxu0 0
    %1553 = vmatpush1.bf16.msra.mxu0 %v1481
    %1554 = vmatprep.subr.bf16.mxu0 0
    %1555 = vmatpush1.bf16.msra.mxu0 %v1482
    %1556 = vmatprep.subr.bf16.mxu0 0
    %1557 = vmatpush1.bf16.msra.mxu0 0
    %1558 = vmatprep.subr.bf16.mxu0 0
    %1559 = vmatpush1.bf16.msra.mxu0 0
    %1560 = vmatprep.subr.bf16.mxu0 0
    %1561 = vmatpush1.bf16.msra.mxu0 0
    %1562 = vmatprep.subr.bf16.mxu0 0
    %1563 = vmatpush1.bf16.msra.mxu0 0
    %1564 = vmatprep.subr.bf16.mxu0 0
    %1565 = vmatpush1.bf16.msra.mxu0 0
    %1566 = vmatprep.subr.bf16.mxu0 0
    %1567 = vmatpush1.bf16.msra.mxu0 0
    %1568 = vmatprep.subr.bf16.mxu0 0
    %1569 = vmatpush1.bf16.msra.mxu0 0
    %1570 = vmatprep.subr.bf16.mxu0 0
    %1571 = vmatpush1.bf16.msra.mxu0 0
    %1572 = vmatprep.mubr.bf16.mxu0 0
    %1573 = vmatmul.mubr.bf16.gmra.mrb[0].mxu0 %v1533
    %v1574 = vpop.f32.mrb[0].mxu0
    %v1575 = vadd.f32 %v1538, %v1574
    %v1576 = vpop.f32.mrb[0].mxu0
    %v1577 = vpop.f32.mrb[0].mxu0
    %v1578 = vpop.f32.mrb[0].mxu0
    %1579 = vdwg.mxu0
    %v1580 = vxor.u32 %v1575, 2147483648
    %v1581 = vmul.f32 %v1580, 1.442695
    %v1582 = vpow.pop %v1581
    %v1583 = vadd.f32 %v1582, 1.0
    %v1584 = vrcp.pop %v1583
    %v1585 = vmul.f32 1.0, %v1584
    %1586 = vst [vmem:[#allocation8] sm:$0xff] %v1585
    // Predicated region
    $region42: #{tpu_custom_call.1} parent=1 // pred_check
      _
    $region43: #{tpu_custom_call.1} parent=1 // pred_check_branch
      %1588 = sbr.rel (0) target = $region45
    $region44: #{tpu_custom_call.1} parent=1 // pred_region
      %s1590 = ssub.s32 128, 128
      %1591 = vsyncadd [#allocation4], %s1590
      %s1593 = sshll.u32 [#allocation8], 4
      %s1594 = int_to_ptr.vmem [resolvable:$true] %s1593
      %1596 = dma.vmem_to_hbm [thread:$0]  %s1594, 128, %s7, [#allocation4]
    $region45: #{tpu_custom_call.1} parent=1 // pred_fallthru
      _
    // Predicated region
    $region46: #{tpu_custom_call.1} parent=1 // pred_check
      _
    $region47: #{tpu_custom_call.1} parent=1 // pred_check_branch
      %1598 = sbr.rel (0) target = $region49
    $region48: #{tpu_custom_call.1} parent=1 // pred_region
      %1599 = dma.done [#allocation4], 128
    $region49: #{tpu_custom_call.1} parent=1 // pred_fallthru
      _
    %1600 = vsyncpa [#allocation3], 1
    %1601 = vsyncpa [#allocation6], 1
    %1602 = vsyncpa [#allocation4], 1

</llo_original>
